<compile_context>
chip_gen: v7x
topology: tpu7x:2x2x1
jax: 0.10.0
libtpu: 0.0.40
codegen_flags: <defaults>
</compile_context>

<pallas_src>
import math

import jax
import jax.numpy as jnp
from jax import lax
from jax.experimental import pallas as pl
from jax.experimental.pallas import tpu as pltpu


_BN_EPS = 1e-5
_LN_EPS = 1e-5


def _round_up(n, m):
    return ((n + m - 1) // m) * m


def _erf(x):
    # Abramowitz & Stegun 7.1.26 rational approximation (|err| <= 1.5e-7).
    # exp lowers to the EUP; the polynomial is VPU work on lane-dense tiles.
    a1, a2, a3, a4, a5 = 0.254829592, -0.284496736, 1.421413741, -1.453152027, 1.061405429
    p = 0.3275911
    ax = jnp.abs(x)
    # pl.reciprocal(1 + p*ax, approx=True) would move this onto the EUP, but
    # the exact division keeps the erf error negligible vs. the 1e-3 test
    # tolerance (the compiler still uses EUP rcp + Newton under the hood).
    t = 1.0 / (1.0 + p * ax)
    poly = ((((a5 * t + a4) * t + a3) * t + a2) * t + a1) * t
    y = 1.0 - poly * jnp.exp(-ax * ax)
    return jnp.where(x >= 0, y, -y)


def _gelu_exact(x):
    # Matches torch.nn.GELU() (erf form), not the tanh approximation.
    return 0.5 * x * (1.0 + _erf(x * (1.0 / math.sqrt(2.0))))


def _act(x, activation):
    return _gelu_exact(x) if activation == 'gelu' else jnp.maximum(x, 0.0)


def _make_embed_kernel(num_layers, activation, ln_eps):
    """Fused kernel: BN-affine + num_layers x (LN -> Linear -> act).

    All intermediate layers are computed channel-major (channels on sublanes,
    tokens on lanes).  The last Linear contracts the channel axes of both
    operands on the MXU and writes the token-major (TL, out_dim) result.
    """

    def kernel(*refs):
        x_ref = refs[0]          # (C, TL)   channel-major token tile
        scale_ref = refs[1]      # (C, 1)    folded BN scale
        shift_ref = refs[2]      # (C, 1)    folded BN shift
        out_ref = refs[-1]       # (TL, out_dim)

        h = x_ref[...].astype(jnp.float32)
        h = h * scale_ref[...] + shift_ref[...]          # eval-mode BatchNorm1d

        idx = 3
        for li in range(num_layers):
            w_ref, b_ref = refs[idx:idx + 2]
            idx += 2
            # LayerNorm over channels (sublane axis).  The LN affine (g, b) is
            # folded into w_ref / b_ref host-side.
            mu = jnp.mean(h, axis=0, keepdims=True)                     # (1, TL)
            var = jnp.mean(jnp.square(h - mu), axis=0, keepdims=True)   # (1, TL)
            hn = (h - mu) * lax.rsqrt(var + ln_eps)                     # (c_in, TL)

            if li + 1 < num_layers:
                # Channel-major Linear: (c_out, c_in) @ (c_in, TL) -> (c_out, TL).
                h = jnp.dot(w_ref[...], hn, preferred_element_type=jnp.float32)
                h = _act(h + b_ref[...], activation)     # bias (c_out, 1)
            else:
                # Last Linear emits token-major directly by contracting the
                # leading (channel) dims: (c_in, TL) x (c_in, c_out) -> (TL, c_out).
                y = lax.dot_general(
                    hn, w_ref[...],
                    dimension_numbers=(((0,), (0,)), ((), ())),
                    preferred_element_type=jnp.float32)
                y = _act(y + b_ref[...], activation)     # bias (1, c_out)
                out_ref[...] = y.astype(out_ref.dtype)

    return kernel


def embed_forward(x, params, *, normalize_input=True, activation='gelu',
                  bn_eps=_BN_EPS, ln_eps=_LN_EPS, token_tile=1024,
                  input_buffers=2):
    """Pallas implementation of Embed.forward (eval mode).

    params = {
      'bn':     (running_mean, running_var, gamma, beta)   # each (C,)
      'layers': [(ln_gamma, ln_beta, W, b), ...]           # W is (C_in, C_out)
    }
    """
    lead_shape = None
    if normalize_input:
        B, C, L = x.shape
        rm, rv, gamma, beta = params['bn']
        scale = (gamma * lax.rsqrt(rv + bn_eps)).astype(jnp.float32)
        shift = (beta - rm * scale).astype(jnp.float32)
    else:
        # Non-default path: tokens arrive feature-last; bring features onto the
        # sublane (channel) axis so the same channel-major kernel applies.
        *lead_shape, C = x.shape
        n_tokens = 1
        for d in lead_shape:
            n_tokens *= d
        x = jnp.transpose(x.reshape(n_tokens, C))[None]   # (1, C, N)
        B, L = 1, n_tokens
        scale = jnp.ones((C,), jnp.float32)
        shift = jnp.zeros((C,), jnp.float32)

    # L tiling: one batch element per grid step along axis 0, TL tokens along
    # axis 1.  Big tiles amortize the ~0.35 us per-step overhead.
    if L <= token_tile:
        TL = L
        Lpad = L
    else:
        TL = max(128, (min(token_tile, L) // 128) * 128)
        Lpad = _round_up(L, TL)
        if Lpad != L:
            # TODO(synk): replace this pad with a masked last tile to avoid the
            # extra copy of x when L is not a multiple of the tile.
            x = jnp.pad(x, ((0, 0), (0, 0), (0, Lpad - L)))

    num_layers = len(params['layers'])

    x_spec = pl.BlockSpec((None, C, TL), lambda b, l: (b, 0, l))
    if input_buffers and input_buffers != 2:
        # Deeper input buffering (e.g. 3) helps hide exposed DMA on v5e.
        x_spec = pl.BlockSpec((None, C, TL), lambda b, l: (b, 0, l),
                              pipeline_mode=pl.Buffered(input_buffers))

    in_specs = [
        x_spec,
        pl.BlockSpec((C, 1), lambda b, l: (0, 0)),
        pl.BlockSpec((C, 1), lambda b, l: (0, 0)),
    ]
    operands = [x, scale.reshape(C, 1), shift.reshape(C, 1)]

    c_in = C
    for li, (lg, lb, w, b) in enumerate(params['layers']):
        c_out = w.shape[1]
        w32 = w.astype(jnp.float32)
        # Fold LayerNorm affine into the Linear:
        #   (hn*g + b) @ W + bias == hn @ (g[:,None]*W) + (b @ W + bias)
        w_eff = lg.astype(jnp.float32)[:, None] * w32            # (c_in, c_out)
        b_eff = lb.astype(jnp.float32) @ w32 + b.astype(jnp.float32)  # (c_out,)
        if li + 1 < num_layers:
            w_op = jnp.transpose(w_eff)          # (c_out, c_in): channel-major
            b_op = b_eff.reshape(c_out, 1)
        else:
            w_op = w_eff                         # (c_in, c_out): token-major out
            b_op = b_eff.reshape(1, c_out)
        in_specs += [
            pl.BlockSpec(w_op.shape, lambda bb, ll: (0, 0)),
            pl.BlockSpec(b_op.shape, lambda bb, ll: (0, 0)),
        ]
        operands += [w_op, b_op]
        c_in = c_out
    out_dim = c_in

    out = pl.pallas_call(
        _make_embed_kernel(num_layers, activation, ln_eps),
        out_shape=jax.ShapeDtypeStruct((B, Lpad, out_dim), x.dtype),
        grid=(B, Lpad // TL),
        in_specs=in_specs,
        out_specs=pl.BlockSpec((None, TL, out_dim), lambda b, l: (b, l, 0)),
        compiler_params=pltpu.CompilerParams(
            dimension_semantics=("parallel", "parallel")),
    )(*operands)

    if Lpad != L:
        out = out[:, :L, :]
    if not normalize_input:
        out = out.reshape(*lead_shape, out_dim)
    return out


def embed_reference(x, params, *, activation='gelu', bn_eps=_BN_EPS, ln_eps=_LN_EPS):
    """Pure-JAX reference matching the PyTorch module in eval mode."""
    rm, rv, gamma, beta = params['bn']
    scale = gamma / jnp.sqrt(rv + bn_eps)
    shift = beta - rm * scale
    h = x * scale[None, :, None] + shift[None, :, None]
    h = jnp.transpose(h, (0, 2, 1))
    for (lg, lb, w, b) in params['layers']:
        mu = jnp.mean(h, axis=-1, keepdims=True)
        var = jnp.mean(jnp.square(h - mu), axis=-1, keepdims=True)
        h = (h - mu) / jnp.sqrt(var + ln_eps) * lg + lb
        h = h @ w + b
        h = jax.nn.gelu(h, approximate=False) if activation == 'gelu' else jnp.maximum(h, 0.0)
    return h


if __name__ == "__main__":
    key = jax.random.PRNGKey(0)
    B, C, L = 2, 16, 512          # batch, input_dim (channels), sequence length
    dims = (32, 64)               # Embed(input_dim=16, dims=[32, 64])

    ks = jax.random.split(key, 4 + 4 * len(dims))
    x = jax.random.normal(ks[0], (B, C, L), dtype=jnp.float32)

    # Eval-mode BatchNorm1d parameters / running stats.
    bn_params = (
        0.1 * jax.random.normal(ks[1], (C,), jnp.float32),           # running_mean
        0.5 + jnp.abs(jax.random.normal(ks[2], (C,), jnp.float32)),  # running_var
        1.0 + 0.1 * jax.random.normal(ks[3], (C,), jnp.float32),     # gamma
        0.1 * jax.random.normal(ks[3], (C,), jnp.float32),           # beta
    )

    layers = []
    c_in = C
    for li, c_out in enumerate(dims):
        kg, kb, kw, kbias = ks[4 + 4 * li: 8 + 4 * li]
        layers.append((
            1.0 + 0.1 * jax.random.normal(kg, (c_in,), jnp.float32),              # LN gamma
            0.1 * jax.random.normal(kb, (c_in,), jnp.float32),                    # LN beta
            jax.random.normal(kw, (c_in, c_out), jnp.float32) / math.sqrt(c_in),  # W (in, out)
            0.1 * jax.random.normal(kbias, (c_out,), jnp.float32),                # bias
        ))
        c_in = c_out

    params = {'bn': bn_params, 'layers': layers}

    # token_tile=256 here so the (B, L//TL) = (2, 2) grid exercises the L-tiling
    # and 2-TensorCore-friendly sharding path at small test shapes; the default
    # (1024) is appropriate for production-sized B*L.
    out = embed_forward(x, params, normalize_input=True, activation='gelu',
                        token_tile=256)
    jax.block_until_ready(out)

    ref = embed_reference(x, params, activation='gelu')
    assert out.shape == (B, L, dims[-1]), out.shape
    max_err = float(jnp.max(jnp.abs(out - ref)))
    assert max_err < 1e-3, f"max abs error {max_err}"

    print("KERNEL_OK")
</pallas_src>

<mosaic_0001>
module attributes {stable_mosaic.version = 11 : i64} {
  func.func @kernel(%arg0: i32, %arg1: i32, %arg2: memref<1x16x256xf32, #tpu.memory_space<vmem>>, %arg3: memref<16x1xf32, #tpu.memory_space<vmem>>, %arg4: memref<16x1xf32, #tpu.memory_space<vmem>>, %arg5: memref<32x16xf32, #tpu.memory_space<vmem>>, %arg6: memref<32x1xf32, #tpu.memory_space<vmem>>, %arg7: memref<32x64xf32, #tpu.memory_space<vmem>>, %arg8: memref<1x64xf32, #tpu.memory_space<vmem>>, %arg9: memref<1x256x64xf32, #tpu.memory_space<vmem>>) attributes {dimension_semantics = [#tpu.dimension_semantics<parallel>, #tpu.dimension_semantics<parallel>], iteration_bounds = array<i64: 2, 2>, scalar_prefetch = 0 : i64, scratch_operands = 0 : i64, tpu.core_type = #tpu.core_type<tc>, window_params = [{transform_indices = @transform_0, window_bounds = array<i64: 1, 16, 256>}, {pipeline_mode = #tpu.pipeline_mode<synchronous>, transform_indices = @transform_1, window_bounds = array<i64: 16, 1>}, {pipeline_mode = #tpu.pipeline_mode<synchronous>, transform_indices = @transform_2, window_bounds = array<i64: 16, 1>}, {pipeline_mode = #tpu.pipeline_mode<synchronous>, transform_indices = @transform_3, window_bounds = array<i64: 32, 16>}, {pipeline_mode = #tpu.pipeline_mode<synchronous>, transform_indices = @transform_4, window_bounds = array<i64: 32, 1>}, {pipeline_mode = #tpu.pipeline_mode<synchronous>, transform_indices = @transform_5, window_bounds = array<i64: 32, 64>}, {pipeline_mode = #tpu.pipeline_mode<synchronous>, transform_indices = @transform_6, window_bounds = array<i64: 1, 64>}, {transform_indices = @transform_7, window_bounds = array<i64: 1, 256, 64>}]} {
    %c0 = arith.constant 0 : index
    %c0_0 = arith.constant 0 : index
    %c0_1 = arith.constant 0 : index
    %0 = vector.load %arg2[%c0, %c0_0, %c0_1] : memref<1x16x256xf32, #tpu.memory_space<vmem>>, vector<1x16x256xf32>
    %1 = vector.shape_cast %0 : vector<1x16x256xf32> to vector<16x256xf32>
    %c0_2 = arith.constant 0 : index
    %c0_3 = arith.constant 0 : index
    %2 = vector.load %arg3[%c0_2, %c0_3] : memref<16x1xf32, #tpu.memory_space<vmem>>, vector<16x1xf32>
    %3 = vector.broadcast %2 : vector<16x1xf32> to vector<16x256xf32>
    %4 = arith.mulf %1, %3 : vector<16x256xf32>
    %c0_4 = arith.constant 0 : index
    %c0_5 = arith.constant 0 : index
    %5 = vector.load %arg4[%c0_4, %c0_5] : memref<16x1xf32, #tpu.memory_space<vmem>>, vector<16x1xf32>
    %6 = vector.broadcast %5 : vector<16x1xf32> to vector<16x256xf32>
    %7 = arith.addf %4, %6 : vector<16x256xf32>
    %cst = arith.constant dense<0.000000e+00> : vector<256xf32>
    %8 = vector.multi_reduction <add>, %7, %cst [0] : vector<16x256xf32> to vector<256xf32>
    %9 = vector.shape_cast %8 : vector<256xf32> to vector<1x256xf32>
    %cst_6 = arith.constant 1.600000e+01 : f32
    %10 = vector.broadcast %cst_6 : f32 to vector<1x256xf32>
    %11 = arith.divf %9, %10 : vector<1x256xf32>
    %12 = vector.broadcast %11 : vector<1x256xf32> to vector<16x256xf32>
    %13 = arith.subf %7, %12 : vector<16x256xf32>
    %14 = arith.mulf %13, %13 : vector<16x256xf32>
    %cst_7 = arith.constant dense<0.000000e+00> : vector<256xf32>
    %15 = vector.multi_reduction <add>, %14, %cst_7 [0] : vector<16x256xf32> to vector<256xf32>
    %16 = vector.shape_cast %15 : vector<256xf32> to vector<1x256xf32>
    %cst_8 = arith.constant 1.600000e+01 : f32
    %17 = vector.broadcast %cst_8 : f32 to vector<1x256xf32>
    %18 = arith.divf %16, %17 : vector<1x256xf32>
    %19 = vector.broadcast %11 : vector<1x256xf32> to vector<16x256xf32>
    %20 = arith.subf %7, %19 : vector<16x256xf32>
    %cst_9 = arith.constant 9.99999974E-6 : f32
    %21 = vector.broadcast %cst_9 : f32 to vector<1x256xf32>
    %22 = arith.addf %18, %21 : vector<1x256xf32>
    %23 = math.rsqrt %22 : vector<1x256xf32>
    %24 = vector.broadcast %23 : vector<1x256xf32> to vector<16x256xf32>
    %25 = arith.mulf %20, %24 : vector<16x256xf32>
    %c0_10 = arith.constant 0 : index
    %c0_11 = arith.constant 0 : index
    %26 = vector.load %arg5[%c0_10, %c0_11] : memref<32x16xf32, #tpu.memory_space<vmem>>, vector<32x16xf32>
    %cst_12 = arith.constant dense<0.000000e+00> : vector<32x256xf32>
    %27 = tpu.matmul %26, %25, %cst_12 {dimension_numbers = #tpu.dot_dimension_numbers<[1], [0], [0], [1], [0, 0, 1, 1], [], []>} : vector<32x16xf32>, vector<16x256xf32>, vector<32x256xf32> -> vector<32x256xf32>
    %c0_13 = arith.constant 0 : index
    %c0_14 = arith.constant 0 : index
    %28 = vector.load %arg6[%c0_13, %c0_14] : memref<32x1xf32, #tpu.memory_space<vmem>>, vector<32x1xf32>
    %29 = vector.broadcast %28 : vector<32x1xf32> to vector<32x256xf32>
    %30 = arith.addf %27, %29 : vector<32x256xf32>
    %cst_15 = arith.constant 5.000000e-01 : f32
    %31 = vector.broadcast %cst_15 : f32 to vector<32x256xf32>
    %32 = arith.mulf %31, %30 : vector<32x256xf32>
    %cst_16 = arith.constant 0.707106769 : f32
    %33 = vector.broadcast %cst_16 : f32 to vector<32x256xf32>
    %34 = arith.mulf %30, %33 : vector<32x256xf32>
    %35 = math.absf %34 : vector<32x256xf32>
    %cst_17 = arith.constant 0.327591091 : f32
    %36 = vector.broadcast %cst_17 : f32 to vector<32x256xf32>
    %37 = arith.mulf %36, %35 : vector<32x256xf32>
    %cst_18 = arith.constant 1.000000e+00 : f32
    %38 = vector.broadcast %cst_18 : f32 to vector<32x256xf32>
    %39 = arith.addf %38, %37 : vector<32x256xf32>
    %cst_19 = arith.constant 1.000000e+00 : f32
    %40 = vector.broadcast %cst_19 : f32 to vector<32x256xf32>
    %41 = arith.divf %40, %39 : vector<32x256xf32>
    %cst_20 = arith.constant 1.06140542 : f32
    %42 = vector.broadcast %cst_20 : f32 to vector<32x256xf32>
    %43 = arith.mulf %42, %41 : vector<32x256xf32>
    %cst_21 = arith.constant -1.45315206 : f32
    %44 = vector.broadcast %cst_21 : f32 to vector<32x256xf32>
    %45 = arith.addf %43, %44 : vector<32x256xf32>
    %46 = arith.mulf %45, %41 : vector<32x256xf32>
    %cst_22 = arith.constant 1.42141378 : f32
    %47 = vector.broadcast %cst_22 : f32 to vector<32x256xf32>
    %48 = arith.addf %46, %47 : vector<32x256xf32>
    %49 = arith.mulf %48, %41 : vector<32x256xf32>
    %cst_23 = arith.constant -0.284496725 : f32
    %50 = vector.broadcast %cst_23 : f32 to vector<32x256xf32>
    %51 = arith.addf %49, %50 : vector<32x256xf32>
    %52 = arith.mulf %51, %41 : vector<32x256xf32>
    %cst_24 = arith.constant 0.254829586 : f32
    %53 = vector.broadcast %cst_24 : f32 to vector<32x256xf32>
    %54 = arith.addf %52, %53 : vector<32x256xf32>
    %55 = arith.mulf %54, %41 : vector<32x256xf32>
    %cst_25 = arith.constant 0.000000e+00 : f32
    %56 = vector.broadcast %cst_25 : f32 to vector<32x256xf32>
    %57 = arith.subf %56, %35 : vector<32x256xf32>
    %58 = arith.mulf %57, %35 : vector<32x256xf32>
    %59 = math.exp %58 : vector<32x256xf32>
    %60 = arith.mulf %55, %59 : vector<32x256xf32>
    %cst_26 = arith.constant 1.000000e+00 : f32
    %61 = vector.broadcast %cst_26 : f32 to vector<32x256xf32>
    %62 = arith.subf %61, %60 : vector<32x256xf32>
    %cst_27 = arith.constant 0.000000e+00 : f32
    %63 = vector.broadcast %cst_27 : f32 to vector<32x256xf32>
    %64 = arith.cmpf oge, %34, %63 : vector<32x256xf32>
    %cst_28 = arith.constant 0.000000e+00 : f32
    %65 = vector.broadcast %cst_28 : f32 to vector<32x256xf32>
    %66 = arith.subf %65, %62 : vector<32x256xf32>
    %67 = arith.select %64, %62, %66 : vector<32x256xi1>, vector<32x256xf32>
    %cst_29 = arith.constant 1.000000e+00 : f32
    %68 = vector.broadcast %cst_29 : f32 to vector<32x256xf32>
    %69 = arith.addf %68, %67 : vector<32x256xf32>
    %70 = arith.mulf %32, %69 : vector<32x256xf32>
    %cst_30 = arith.constant dense<0.000000e+00> : vector<256xf32>
    %71 = vector.multi_reduction <add>, %70, %cst_30 [0] : vector<32x256xf32> to vector<256xf32>
    %72 = vector.shape_cast %71 : vector<256xf32> to vector<1x256xf32>
    %cst_31 = arith.constant 3.200000e+01 : f32
    %73 = vector.broadcast %cst_31 : f32 to vector<1x256xf32>
    %74 = arith.divf %72, %73 : vector<1x256xf32>
    %75 = vector.broadcast %74 : vector<1x256xf32> to vector<32x256xf32>
    %76 = arith.subf %70, %75 : vector<32x256xf32>
    %77 = arith.mulf %76, %76 : vector<32x256xf32>
    %cst_32 = arith.constant dense<0.000000e+00> : vector<256xf32>
    %78 = vector.multi_reduction <add>, %77, %cst_32 [0] : vector<32x256xf32> to vector<256xf32>
    %79 = vector.shape_cast %78 : vector<256xf32> to vector<1x256xf32>
    %cst_33 = arith.constant 3.200000e+01 : f32
    %80 = vector.broadcast %cst_33 : f32 to vector<1x256xf32>
    %81 = arith.divf %79, %80 : vector<1x256xf32>
    %82 = vector.broadcast %74 : vector<1x256xf32> to vector<32x256xf32>
    %83 = arith.subf %70, %82 : vector<32x256xf32>
    %cst_34 = arith.constant 9.99999974E-6 : f32
    %84 = vector.broadcast %cst_34 : f32 to vector<1x256xf32>
    %85 = arith.addf %81, %84 : vector<1x256xf32>
    %86 = math.rsqrt %85 : vector<1x256xf32>
    %87 = vector.broadcast %86 : vector<1x256xf32> to vector<32x256xf32>
    %88 = arith.mulf %83, %87 : vector<32x256xf32>
    %c0_35 = arith.constant 0 : index
    %c0_36 = arith.constant 0 : index
    %89 = vector.load %arg7[%c0_35, %c0_36] : memref<32x64xf32, #tpu.memory_space<vmem>>, vector<32x64xf32>
    %cst_37 = arith.constant dense<0.000000e+00> : vector<256x64xf32>
    %90 = tpu.matmul %88, %89, %cst_37 {dimension_numbers = #tpu.dot_dimension_numbers<[0], [0], [1], [1], [0, 1, 1, 1], [], []>} : vector<32x256xf32>, vector<32x64xf32>, vector<256x64xf32> -> vector<256x64xf32>
    %c0_38 = arith.constant 0 : index
    %c0_39 = arith.constant 0 : index
    %91 = vector.load %arg8[%c0_38, %c0_39] : memref<1x64xf32, #tpu.memory_space<vmem>>, vector<1x64xf32>
    %92 = vector.broadcast %91 : vector<1x64xf32> to vector<256x64xf32>
    %93 = arith.addf %90, %92 : vector<256x64xf32>
    %cst_40 = arith.constant 5.000000e-01 : f32
    %94 = vector.broadcast %cst_40 : f32 to vector<256x64xf32>
    %95 = arith.mulf %94, %93 : vector<256x64xf32>
    %cst_41 = arith.constant 0.707106769 : f32
    %96 = vector.broadcast %cst_41 : f32 to vector<256x64xf32>
    %97 = arith.mulf %93, %96 : vector<256x64xf32>
    %98 = math.absf %97 : vector<256x64xf32>
    %cst_42 = arith.constant 0.327591091 : f32
    %99 = vector.broadcast %cst_42 : f32 to vector<256x64xf32>
    %100 = arith.mulf %99, %98 : vector<256x64xf32>
    %cst_43 = arith.constant 1.000000e+00 : f32
    %101 = vector.broadcast %cst_43 : f32 to vector<256x64xf32>
    %102 = arith.addf %101, %100 : vector<256x64xf32>
    %cst_44 = arith.constant 1.000000e+00 : f32
    %103 = vector.broadcast %cst_44 : f32 to vector<256x64xf32>
    %104 = arith.divf %103, %102 : vector<256x64xf32>
    %cst_45 = arith.constant 1.06140542 : f32
    %105 = vector.broadcast %cst_45 : f32 to vector<256x64xf32>
    %106 = arith.mulf %105, %104 : vector<256x64xf32>
    %cst_46 = arith.constant -1.45315206 : f32
    %107 = vector.broadcast %cst_46 : f32 to vector<256x64xf32>
    %108 = arith.addf %106, %107 : vector<256x64xf32>
    %109 = arith.mulf %108, %104 : vector<256x64xf32>
    %cst_47 = arith.constant 1.42141378 : f32
    %110 = vector.broadcast %cst_47 : f32 to vector<256x64xf32>
    %111 = arith.addf %109, %110 : vector<256x64xf32>
    %112 = arith.mulf %111, %104 : vector<256x64xf32>
    %cst_48 = arith.constant -0.284496725 : f32
    %113 = vector.broadcast %cst_48 : f32 to vector<256x64xf32>
    %114 = arith.addf %112, %113 : vector<256x64xf32>
    %115 = arith.mulf %114, %104 : vector<256x64xf32>
    %cst_49 = arith.constant 0.254829586 : f32
    %116 = vector.broadcast %cst_49 : f32 to vector<256x64xf32>
    %117 = arith.addf %115, %116 : vector<256x64xf32>
    %118 = arith.mulf %117, %104 : vector<256x64xf32>
    %cst_50 = arith.constant 0.000000e+00 : f32
    %119 = vector.broadcast %cst_50 : f32 to vector<256x64xf32>
    %120 = arith.subf %119, %98 : vector<256x64xf32>
    %121 = arith.mulf %120, %98 : vector<256x64xf32>
    %122 = math.exp %121 : vector<256x64xf32>
    %123 = arith.mulf %118, %122 : vector<256x64xf32>
    %cst_51 = arith.constant 1.000000e+00 : f32
    %124 = vector.broadcast %cst_51 : f32 to vector<256x64xf32>
    %125 = arith.subf %124, %123 : vector<256x64xf32>
    %cst_52 = arith.constant 0.000000e+00 : f32
    %126 = vector.broadcast %cst_52 : f32 to vector<256x64xf32>
    %127 = arith.cmpf oge, %97, %126 : vector<256x64xf32>
    %cst_53 = arith.constant 0.000000e+00 : f32
    %128 = vector.broadcast %cst_53 : f32 to vector<256x64xf32>
    %129 = arith.subf %128, %125 : vector<256x64xf32>
    %130 = arith.select %127, %125, %129 : vector<256x64xi1>, vector<256x64xf32>
    %cst_54 = arith.constant 1.000000e+00 : f32
    %131 = vector.broadcast %cst_54 : f32 to vector<256x64xf32>
    %132 = arith.addf %131, %130 : vector<256x64xf32>
    %133 = arith.mulf %95, %132 : vector<256x64xf32>
    %c0_55 = arith.constant 0 : index
    %c0_56 = arith.constant 0 : index
    %c0_57 = arith.constant 0 : index
    %134 = vector.load %arg9[%c0_55, %c0_56, %c0_57] : memref<1x256x64xf32, #tpu.memory_space<vmem>>, vector<1x256x64xf32>
    %135 = vector.shape_cast %134 : vector<1x256x64xf32> to vector<256x64xf32>
    %136 = vector.shape_cast %133 : vector<256x64xf32> to vector<1x256x64xf32>
    tpu.vector_store %arg9[%c0_55, %c0_56, %c0_57], %136 {strides = array<i32>} : memref<1x256x64xf32, #tpu.memory_space<vmem>>, vector<1x256x64xf32>,
    return
  }
  func.func @transform_0(%arg0: i32, %arg1: i32) -> (i32, i32, i32) {
    %c0_i32 = arith.constant 0 : i32
    %c0_i32_0 = arith.constant 0 : i32
    return %arg0, %c0_i32, %arg1 : i32, i32, i32
  }
  func.func @transform_1(%arg0: i32, %arg1: i32) -> (i32, i32) {
    %c0_i32 = arith.constant 0 : i32
    %c0_i32_0 = arith.constant 0 : i32
    %c0_i32_1 = arith.constant 0 : i32
    return %c0_i32, %c0_i32_0 : i32, i32
  }
  func.func @transform_2(%arg0: i32, %arg1: i32) -> (i32, i32) {
    %c0_i32 = arith.constant 0 : i32
    %c0_i32_0 = arith.constant 0 : i32
    %c0_i32_1 = arith.constant 0 : i32
    return %c0_i32, %c0_i32_0 : i32, i32
  }
  func.func @transform_3(%arg0: i32, %arg1: i32) -> (i32, i32) {
    %c0_i32 = arith.constant 0 : i32
    %c0_i32_0 = arith.constant 0 : i32
    %c0_i32_1 = arith.constant 0 : i32
    return %c0_i32, %c0_i32_0 : i32, i32
  }
  func.func @transform_4(%arg0: i32, %arg1: i32) -> (i32, i32) {
    %c0_i32 = arith.constant 0 : i32
    %c0_i32_0 = arith.constant 0 : i32
    %c0_i32_1 = arith.constant 0 : i32
    return %c0_i32, %c0_i32_0 : i32, i32
  }
  func.func @transform_5(%arg0: i32, %arg1: i32) -> (i32, i32) {
    %c0_i32 = arith.constant 0 : i32
    %c0_i32_0 = arith.constant 0 : i32
    %c0_i32_1 = arith.constant 0 : i32
    return %c0_i32, %c0_i32_0 : i32, i32
  }
  func.func @transform_6(%arg0: i32, %arg1: i32) -> (i32, i32) {
    %c0_i32 = arith.constant 0 : i32
    %c0_i32_0 = arith.constant 0 : i32
    %c0_i32_1 = arith.constant 0 : i32
    return %c0_i32, %c0_i32_0 : i32, i32
  }
  func.func @transform_7(%arg0: i32, %arg1: i32) -> (i32, i32, i32) {
    %c0_i32 = arith.constant 0 : i32
    %c0_i32_0 = arith.constant 0 : i32
    return %arg0, %arg1, %c0_i32 : i32, i32, i32
  }
}

</mosaic_0001>

<llo_original>
// kernel: tpu_custom_call.1
$region0: #{tpu_custom_call.1}
  #allocation0 [shape = 'u32[]', space=smem, size = 0x4, offset = 0x4, fixed_abs, tag = 'smem constant byte address 0x4 - core index']
  #allocation1 [shape = 'u32[144,128]{1,0:T(1,128)}', space=vmem, size = 0x12000, scoped, tag = 'internal scratch']
  %s0 = inlined_call_operand.hbm [shape: f32[2,16,512], index: 0, kind: input, shape index: {}]
  %s1 = inlined_call_operand.vmem [shape: f32[16,1], index: 1, kind: input, shape index: {}]
  %s2 = inlined_call_operand.vmem [shape: f32[16,1], index: 2, kind: input, shape index: {}]
  %s3 = inlined_call_operand.vmem [shape: f32[32,16], index: 3, kind: input, shape index: {}]
  %s4 = inlined_call_operand.vmem [shape: f32[32,1], index: 4, kind: input, shape index: {}]
  %s5 = inlined_call_operand.vmem [shape: f32[32,64], index: 5, kind: input, shape index: {}]
  %s6 = inlined_call_operand.vmem [shape: f32[1,64], index: 6, kind: input, shape index: {}]
  %s7 = inlined_call_operand.vmem [shape: f32[2,512,64], index: 7, kind: output, shape index: {}]
  %s8 = sld [smem:[#allocation0]]
  $region65: #{tpu_custom_call.1} parent=0
    _
  %s10 = ssub.s32 1, %s8
  %s11 = scalar_select 0, %s10, %s8
  $region1: #{tpu_custom_call.1} parent=0
    #allocation2 [shape = 'u8[32768]{0}', space=vmem, size = 0x8000, scoped, tag = 'input window, operand 0']
    #allocation3 [shape = 's32[2]{0}', space=sflag, size = 0x8, scoped, tag = 'scoped memory for tpu_custom_call.1']
    %12 = vsyncpa [#allocation3], 0
    %s13 = scalar_lea.sflag [#allocation3], 1
    %14 = vsyncpa %s13, 0
    loop: start=0, step=1, limit=6
    $region2: #{tpu_custom_call.1} parent=1 // loop_pre_header
      _
    $region3: #{tpu_custom_call.1} parent=1 // loop_header
      %s16 = sphi 0, %s20
      %p17 = scmp.ge.s32.totalorder %s16, 6
      %s23 = sphi 0, %s35
      %s24 = sphi 0, %s31
      %s25 = sphi 0, %s23
      %s26 = sphi 0, %s24
      %s27 = sphi 0, %s25
      %s28 = sphi 0, %s26
      %s40 = sphi 0, %s42
      %s43 = sphi 0, %s40
      %s44 = sphi 0, %s43
      %s60 = sphi 0, %s44
      %s64 = sphi 0, %s64
      %s66 = sphi 0, %s64
      %s67 = sphi 0, %s66
      %s81 = sphi 0, %s67
      %s85 = sphi 0, %s85
      %s87 = sphi 0, %s85
      %s88 = sphi 0, %s87
      %s102 = sphi 0, %s88
      %s106 = sphi 0, %s106
      %s108 = sphi 0, %s106
      %s109 = sphi 0, %s108
      %s123 = sphi 0, %s109
      %s127 = sphi 0, %s127
      %s129 = sphi 0, %s127
      %s130 = sphi 0, %s129
      %s144 = sphi 0, %s130
      %s148 = sphi 0, %s148
      %s150 = sphi 0, %s148
      %s151 = sphi 0, %s150
      %s165 = sphi 0, %s151
      %s169 = sphi 0, %s169
      %s171 = sphi 0, %s169
      %s172 = sphi 0, %s171
      %s186 = sphi 0, %s172
      %s194 = sphi 0, %s196
      %s197 = sphi 0, %s194
      %s198 = sphi 0, %s197
      %s214 = sphi 0, %s198
    $region4: #{tpu_custom_call.1} parent=1 // loop_header_branch
      %19 = sbr.rel (%p17) target = $region8
    $region5: #{tpu_custom_call.1} parent=1 // loop_body
      %s21 = ssub.s32 %s16, 1
      %s22 = ssub.s32 %s16, 2
      %s29 = sadd.s32 1, %s24
      %p30 = scmp.ge.s32.totalorder %s29, 2
      %s31 = scalar_select %p30, 0, %s29
      %s32 = sadd.s32 1, %s23
      %s33 = scalar_select %p30, %s32, %s23
      %p34 = scmp.ge.s32.totalorder %s33, 2
      %s35 = scalar_select %p34, 0, %s33
      %s36 = ssub.s32 %s23, %s35
      %s37 = ssub.s32 %s24, %s31
      %s38 = sor.u32 %s36, %s37
      %p39 = scmp.eq.s32.totalorder %s38, 0
      %s41 = sadd.s32 %s40, 1
      %s42 = scalar_select %p39, %s40, %s41
      %p45 = pneg %p39
      %p46 = scmp.eq.s32.totalorder %s16, 3
      %p47 = por %p45, %p46
      %p48 = scmp.ne.s32.totalorder %s40, %s43
      %p49 = scmp.eq.s32.totalorder %s16, 0
      %p50 = por %p48, %p49
      %p51 = scmp.ne.s32.totalorder %s40, %s43
      %p52 = scmp.eq.s32.totalorder %s21, 3
      %p53 = por %p51, %p52
      %p54 = scmp.ne.s32.totalorder %s43, %s44
      %p55 = scmp.eq.s32.totalorder %s21, 0
      %p56 = por %p54, %p55
      %p57 = scmp.ne.s32.totalorder %s43, %s44
      %p58 = scmp.eq.s32.totalorder %s22, 3
      %p59 = por %p57, %p58
      %p61 = scmp.ne.s32.totalorder %s44, %s60
      %p62 = scmp.eq.s32.totalorder %s22, 0
      %p63 = por %p61, %p62
      %s65 = sadd.s32 %s64, 1
      %p68 = scmp.eq.s32.totalorder %s16, 3
      %p69 = scmp.ne.s32.totalorder %s64, %s66
      %p70 = scmp.eq.s32.totalorder %s16, 0
      %p71 = por %p69, %p70
      %p72 = scmp.ne.s32.totalorder %s64, %s66
      %p73 = scmp.eq.s32.totalorder %s21, 3
      %p74 = por %p72, %p73
      %p75 = scmp.ne.s32.totalorder %s66, %s67
      %p76 = scmp.eq.s32.totalorder %s21, 0
      %p77 = por %p75, %p76
      %p78 = scmp.ne.s32.totalorder %s66, %s67
      %p79 = scmp.eq.s32.totalorder %s22, 3
      %p80 = por %p78, %p79
      %p82 = scmp.ne.s32.totalorder %s67, %s81
      %p83 = scmp.eq.s32.totalorder %s22, 0
      %p84 = por %p82, %p83
      %s86 = sadd.s32 %s85, 1
      %p89 = scmp.eq.s32.totalorder %s16, 3
      %p90 = scmp.ne.s32.totalorder %s85, %s87
      %p91 = scmp.eq.s32.totalorder %s16, 0
      %p92 = por %p90, %p91
      %p93 = scmp.ne.s32.totalorder %s85, %s87
      %p94 = scmp.eq.s32.totalorder %s21, 3
      %p95 = por %p93, %p94
      %p96 = scmp.ne.s32.totalorder %s87, %s88
      %p97 = scmp.eq.s32.totalorder %s21, 0
      %p98 = por %p96, %p97
      %p99 = scmp.ne.s32.totalorder %s87, %s88
      %p100 = scmp.eq.s32.totalorder %s22, 3
      %p101 = por %p99, %p100
      %p103 = scmp.ne.s32.totalorder %s88, %s102
      %p104 = scmp.eq.s32.totalorder %s22, 0
      %p105 = por %p103, %p104
      %s107 = sadd.s32 %s106, 1
      %p110 = scmp.eq.s32.totalorder %s16, 3
      %p111 = scmp.ne.s32.totalorder %s106, %s108
      %p112 = scmp.eq.s32.totalorder %s16, 0
      %p113 = por %p111, %p112
      %p114 = scmp.ne.s32.totalorder %s106, %s108
      %p115 = scmp.eq.s32.totalorder %s21, 3
      %p116 = por %p114, %p115
      %p117 = scmp.ne.s32.totalorder %s108, %s109
      %p118 = scmp.eq.s32.totalorder %s21, 0
      %p119 = por %p117, %p118
      %p120 = scmp.ne.s32.totalorder %s108, %s109
      %p121 = scmp.eq.s32.totalorder %s22, 3
      %p122 = por %p120, %p121
      %p124 = scmp.ne.s32.totalorder %s109, %s123
      %p125 = scmp.eq.s32.totalorder %s22, 0
      %p126 = por %p124, %p125
      %s128 = sadd.s32 %s127, 1
      %p131 = scmp.eq.s32.totalorder %s16, 3
      %p132 = scmp.ne.s32.totalorder %s127, %s129
      %p133 = scmp.eq.s32.totalorder %s16, 0
      %p134 = por %p132, %p133
      %p135 = scmp.ne.s32.totalorder %s127, %s129
      %p136 = scmp.eq.s32.totalorder %s21, 3
      %p137 = por %p135, %p136
      %p138 = scmp.ne.s32.totalorder %s129, %s130
      %p139 = scmp.eq.s32.totalorder %s21, 0
      %p140 = por %p138, %p139
      %p141 = scmp.ne.s32.totalorder %s129, %s130
      %p142 = scmp.eq.s32.totalorder %s22, 3
      %p143 = por %p141, %p142
      %p145 = scmp.ne.s32.totalorder %s130, %s144
      %p146 = scmp.eq.s32.totalorder %s22, 0
      %p147 = por %p145, %p146
      %s149 = sadd.s32 %s148, 1
      %p152 = scmp.eq.s32.totalorder %s16, 3
      %p153 = scmp.ne.s32.totalorder %s148, %s150
      %p154 = scmp.eq.s32.totalorder %s16, 0
      %p155 = por %p153, %p154
      %p156 = scmp.ne.s32.totalorder %s148, %s150
      %p157 = scmp.eq.s32.totalorder %s21, 3
      %p158 = por %p156, %p157
      %p159 = scmp.ne.s32.totalorder %s150, %s151
      %p160 = scmp.eq.s32.totalorder %s21, 0
      %p161 = por %p159, %p160
      %p162 = scmp.ne.s32.totalorder %s150, %s151
      %p163 = scmp.eq.s32.totalorder %s22, 3
      %p164 = por %p162, %p163
      %p166 = scmp.ne.s32.totalorder %s151, %s165
      %p167 = scmp.eq.s32.totalorder %s22, 0
      %p168 = por %p166, %p167
      %s170 = sadd.s32 %s169, 1
      %p173 = scmp.eq.s32.totalorder %s16, 3
      %p174 = scmp.ne.s32.totalorder %s169, %s171
      %p175 = scmp.eq.s32.totalorder %s16, 0
      %p176 = por %p174, %p175
      %p177 = scmp.ne.s32.totalorder %s169, %s171
      %p178 = scmp.eq.s32.totalorder %s21, 3
      %p179 = por %p177, %p178
      %p180 = scmp.ne.s32.totalorder %s171, %s172
      %p181 = scmp.eq.s32.totalorder %s21, 0
      %p182 = por %p180, %p181
      %p183 = scmp.ne.s32.totalorder %s171, %s172
      %p184 = scmp.eq.s32.totalorder %s22, 3
      %p185 = por %p183, %p184
      %p187 = scmp.ne.s32.totalorder %s172, %s186
      %p188 = scmp.eq.s32.totalorder %s22, 0
      %p189 = por %p187, %p188
      %s190 = ssub.s32 %s23, %s35
      %s191 = ssub.s32 %s24, %s31
      %s192 = sor.u32 %s190, %s191
      %p193 = scmp.eq.s32.totalorder %s192, 0
      %s195 = sadd.s32 %s194, 1
      %s196 = scalar_select %p193, %s194, %s195
      %p199 = pneg %p193
      %p200 = scmp.eq.s32.totalorder %s16, 3
      %p201 = por %p199, %p200
      %p202 = scmp.ne.s32.totalorder %s194, %s197
      %p203 = scmp.eq.s32.totalorder %s16, 0
      %p204 = por %p202, %p203
      %p205 = scmp.ne.s32.totalorder %s194, %s197
      %p206 = scmp.eq.s32.totalorder %s21, 3
      %p207 = por %p205, %p206
      %p208 = scmp.ne.s32.totalorder %s197, %s198
      %p209 = scmp.eq.s32.totalorder %s21, 0
      %p210 = por %p208, %p209
      %p211 = scmp.ne.s32.totalorder %s197, %s198
      %p212 = scmp.eq.s32.totalorder %s22, 3
      %p213 = por %p211, %p212
      %p215 = scmp.ne.s32.totalorder %s198, %s214
      %p216 = scmp.eq.s32.totalorder %s22, 0
      %p217 = por %p215, %p216
      %p218 = scmp.le.s32.totalorder 1, %s16
      %p219 = scmp.lt.s32.totalorder %s16, 5
      %p220 = pnand %p218, %p219
      %p221 = pneg %p220
      // Predicated region
      $region9: #{tpu_custom_call.1} parent=5 // pred_check
        _
      $region10: #{tpu_custom_call.1} parent=5 // pred_check_branch
        %223 = sbr.rel (%p220) target = $region12
      $region11: #{tpu_custom_call.1} parent=5 // pred_region
        %s224 = ssub.s32 %s16, 1
        // Predicated region
        $region13: #{tpu_custom_call.1} parent=11 // pred_check
          %p225 = pneg %p77
        $region14: #{tpu_custom_call.1} parent=11 // pred_check_branch
          %227 = sbr.rel (%p225) target = $region16
        $region15: #{tpu_custom_call.1} parent=11 // pred_region
          _
        $region16: #{tpu_custom_call.1} parent=11 // pred_fallthru
          _
        // Predicated region
        $region17: #{tpu_custom_call.1} parent=11 // pred_check
          %p228 = pneg %p98
        $region18: #{tpu_custom_call.1} parent=11 // pred_check_branch
          %230 = sbr.rel (%p228) target = $region20
        $region19: #{tpu_custom_call.1} parent=11 // pred_region
          _
        $region20: #{tpu_custom_call.1} parent=11 // pred_fallthru
          _
        // Predicated region
        $region21: #{tpu_custom_call.1} parent=11 // pred_check
          %p231 = pneg %p119
        $region22: #{tpu_custom_call.1} parent=11 // pred_check_branch
          %233 = sbr.rel (%p231) target = $region24
        $region23: #{tpu_custom_call.1} parent=11 // pred_region
          _
        $region24: #{tpu_custom_call.1} parent=11 // pred_fallthru
          _
        // Predicated region
        $region25: #{tpu_custom_call.1} parent=11 // pred_check
          %p234 = pneg %p140
        $region26: #{tpu_custom_call.1} parent=11 // pred_check_branch
          %236 = sbr.rel (%p234) target = $region28
        $region27: #{tpu_custom_call.1} parent=11 // pred_region
          _
        $region28: #{tpu_custom_call.1} parent=11 // pred_fallthru
          _
        // Predicated region
        $region29: #{tpu_custom_call.1} parent=11 // pred_check
          %p237 = pneg %p161
        $region30: #{tpu_custom_call.1} parent=11 // pred_check_branch
          %239 = sbr.rel (%p237) target = $region32
        $region31: #{tpu_custom_call.1} parent=11 // pred_region
          _
        $region32: #{tpu_custom_call.1} parent=11 // pred_fallthru
          _
        // Predicated region
        $region33: #{tpu_custom_call.1} parent=11 // pred_check
          %p240 = pneg %p182
        $region34: #{tpu_custom_call.1} parent=11 // pred_check_branch
          %242 = sbr.rel (%p240) target = $region36
        $region35: #{tpu_custom_call.1} parent=11 // pred_region
          _
        $region36: #{tpu_custom_call.1} parent=11 // pred_fallthru
          _
      $region12: #{tpu_custom_call.1} parent=5 // pred_fallthru
        _
      %p243 = scmp.lt.s32.totalorder %s16, 4
      // Predicated region
      $region37: #{tpu_custom_call.1} parent=5 // pred_check
        %p244 = pneg %p243
      $region38: #{tpu_custom_call.1} parent=5 // pred_check_branch
        %246 = sbr.rel (%p244) target = $region40
      $region39: #{tpu_custom_call.1} parent=5 // pred_region
        // Predicated region
        $region41: #{tpu_custom_call.1} parent=39 // pred_check
          %p247 = pneg %p50
        $region42: #{tpu_custom_call.1} parent=39 // pred_check_branch
          %249 = sbr.rel (%p247) target = $region44
        $region43: #{tpu_custom_call.1} parent=39 // pred_region
          %s250 = sand.u32 %s40, 1
          %s251 = scalar_lea.sflag [#allocation3], %s250
          %s252 = sand.u32 %s40, 1
          %s253 = smul.addr %s252, 32
          %s254 = scalar_lea.vmem [#allocation2], %s253
          %s255 = smul.u32 2, %s24
          %s257 = ssub.s32 512, 512
          %258 = vsyncadd %s251, %s257
          %s259 = smul.addr %s23, 8
          %s260 = sadd.s32 %s255, %s259
          %s261 = smul.addr %s260, 128
          %s262 = scalar_lea.hbm %s0, %s261
          %s263 = sshll.u32 %s254, 4
          %s264 = int_to_ptr.vmem [resolvable:$true] %s263
          %269 = dma.hbm_to_vmem [thread:$0]  %s262, 512, %s264, %s251, 512, 256, 16
        $region44: #{tpu_custom_call.1} parent=39 // pred_fallthru
          _
      $region40: #{tpu_custom_call.1} parent=5 // pred_fallthru
        _
      %p270 = scmp.le.s32.totalorder 1, %s16
      %p271 = scmp.lt.s32.totalorder %s16, 5
      %p272 = pnand %p270, %p271
      %p273 = pneg %p272
      // Predicated region
      $region45: #{tpu_custom_call.1} parent=5 // pred_check
        _
      $region46: #{tpu_custom_call.1} parent=5 // pred_check_branch
        %275 = sbr.rel (%p272) target = $region48
      $region47: #{tpu_custom_call.1} parent=5 // pred_region
        %s276 = ssub.s32 %s16, 1
        %s277 = sand.u32 %s43, 1
        %s278 = scalar_lea.sflag [#allocation3], %s277
        %s279 = sand.u32 %s43, 1
        %s280 = smul.addr %s279, 32
        %s281 = scalar_lea.vmem [#allocation2], %s280
        // Predicated region
        $region49: #{tpu_custom_call.1} parent=47 // pred_check
          %p282 = pneg %p56
        $region50: #{tpu_custom_call.1} parent=47 // pred_check_branch
          %284 = sbr.rel (%p282) target = $region52
        $region51: #{tpu_custom_call.1} parent=47 // pred_region
          %285 = dma.done %s278, 512
        $region52: #{tpu_custom_call.1} parent=47 // pred_fallthru
          _
        %s286 = sand.u32 %s43, 1
        %s287 = scalar_lea.sflag [#allocation3], %s286
        %s288 = sand.u32 %s43, 1
        %s289 = smul.addr %s288, 32
        %s290 = scalar_lea.vmem [#allocation2], %s289
        %p291 = pneg %p56
        %p292 = pneg %p53
        %p293 = pneg %p77
        %p294 = pneg %p74
        %p295 = pneg %p98
        %p296 = pneg %p95
        %p297 = pneg %p119
        %p298 = pneg %p116
        %p299 = pneg %p140
        %p300 = pneg %p137
        %p301 = pneg %p161
        %p302 = pneg %p158
        %p303 = pneg %p182
        %p304 = pneg %p179
        %p305 = pneg %p210
        %p306 = pneg %p207
        %s307 = smul.u32 32, %s26
        %p308 = scmp.lt.s32.totalorder %s25, 1
        %s309 = scalar_select %p308, %s25, 1
        %p310 = scmp.lt.s32.totalorder %s307, 63
        %s311 = scalar_select %p310, %s307, 63
        %s312 = smul.addr %s309, 64
        %s313 = sadd.s32 %s311, %s312
        %s314 = smul.addr %s313, 8
        %s315 = scalar_lea.vmem %s7, %s314
        %s316 = smul.u32 2, %s26
        %s317 = smul.u32 32, %s26
        %p318 = scmp.lt.s32.totalorder %s25, 1
        %s319 = scalar_select %p318, %s25, 1
        %p320 = scmp.lt.s32.totalorder %s317, 63
        %s321 = scalar_select %p320, %s317, 63
        %s322 = smul.addr %s319, 64
        %s323 = sadd.s32 %s321, %s322
        %s324 = smul.addr %s323, 8
        %s325 = scalar_lea.vmem %s7, %s324
        %s326 = smul.u32 32, %s26
        %v327 = vld [vmem:[%s281] sm:$0xff]
        %v328 = vld [vmem:[%s281 + $0x8] sm:$0xff]
        %v329 = vld [vmem:[%s281 + $0x10] sm:$0xff]
        %v330 = vld [vmem:[%s281 + $0x18] sm:$0xff]
        %v331 = vld [vmem:[%s1] sm:$0xff]
        %v332 = vld [vmem:[%s1 + $0x8] sm:$0xff]
        %334 = vset.pattern.permute.xlu0 0
        %335 = vperm.xlu0 %334, %v331
        %v336 = vpop.permute.xlu0 %335
        %339 = vset.pattern.permute.xlu0 0
        %340 = vperm.xlu0 %339, %v332
        %v341 = vpop.permute.xlu0 %340
        %v343 = vmul.f32 %v327, %v336
        %v344 = vmul.f32 %v328, %v336
        %v345 = vmul.f32 %v329, %v341
        %v346 = vmul.f32 %v330, %v341
        %v347 = vld [vmem:[%s2] sm:$0xff]
        %v348 = vld [vmem:[%s2 + $0x8] sm:$0xff]
        %350 = vset.pattern.permute.xlu0 0
        %351 = vperm.xlu0 %350, %v347
        %v352 = vpop.permute.xlu0 %351
        %355 = vset.pattern.permute.xlu0 0
        %356 = vperm.xlu0 %355, %v348
        %v357 = vpop.permute.xlu0 %356
        %v359 = vadd.f32 %v343, %v352
        %v360 = vadd.f32 %v344, %v352
        %v361 = vadd.f32 %v345, %v357
        %v362 = vadd.f32 %v346, %v357
        %v363 = vadd.f32 %v359, %v361
        %v364 = vrot.slane %v363, 4
        %v365 = vadd.f32 %v363, %v364
        %v366 = vrot.slane %v365, 2
        %v367 = vadd.f32 %v365, %v366
        %v368 = vrot.slane %v367, 1
        %v369 = vadd.f32 %v367, %v368
        %v370 = vadd.f32 %v360, %v362
        %v371 = vrot.slane %v370, 4
        %v372 = vadd.f32 %v370, %v371
        %v373 = vrot.slane %v372, 2
        %v374 = vadd.f32 %v372, %v373
        %v375 = vrot.slane %v374, 1
        %v376 = vadd.f32 %v374, %v375
        %v377 = vrcp.pop 16.0
        %v378 = vmul.f32 %v369, %v377
        %v379 = vmul.f32 %v376, %v377
        %v380 = vsub.f32 %v359, %v378
        %v381 = vsub.f32 %v360, %v379
        %v382 = vsub.f32 %v361, %v378
        %v383 = vsub.f32 %v362, %v379
        %v384 = vmul.f32 %v380, %v380
        %v385 = vmul.f32 %v381, %v381
        %v386 = vmul.f32 %v382, %v382
        %v387 = vmul.f32 %v383, %v383
        %v388 = vadd.f32 %v384, %v386
        %v389 = vrot.slane %v388, 4
        %v390 = vadd.f32 %v388, %v389
        %v391 = vrot.slane %v390, 2
        %v392 = vadd.f32 %v390, %v391
        %v393 = vrot.slane %v392, 1
        %v394 = vadd.f32 %v392, %v393
        %v395 = vadd.f32 %v385, %v387
        %v396 = vrot.slane %v395, 4
        %v397 = vadd.f32 %v395, %v396
        %v398 = vrot.slane %v397, 2
        %v399 = vadd.f32 %v397, %v398
        %v400 = vrot.slane %v399, 1
        %v401 = vadd.f32 %v399, %v400
        %v402 = vmul.f32 %v394, %v377
        %v403 = vmul.f32 %v401, %v377
        %v404 = vadd.f32 %v402, 1e-05
        %v405 = vadd.f32 %v403, 1e-05
        %v406 = vrsqrt.pop %v404
        %v407 = vrsqrt.pop %v405
        %v408 = vmul.f32 %v380, %v406
        %v409 = vmul.f32 %v381, %v407
        %v410 = vmul.f32 %v382, %v406
        %v411 = vmul.f32 %v383, %v407
        %v412 = vld [vmem:[%s3] sm:$0xff]
        %v413 = vld [vmem:[%s3 + $0x8] sm:$0xff]
        %v414 = vld [vmem:[%s3 + $0x10] sm:$0xff]
        %v415 = vld [vmem:[%s3 + $0x18] sm:$0xff]
        %v416 = vld [vmem:[%s4] sm:$0xff]
        %v417 = vld [vmem:[%s4 + $0x8] sm:$0xff]
        %v418 = vld [vmem:[%s4 + $0x10] sm:$0xff]
        %v419 = vld [vmem:[%s4 + $0x18] sm:$0xff]
        %421 = vset.pattern.permute.xlu0 0
        %422 = vperm.xlu0 %421, %v416
        %v423 = vpop.permute.xlu0 %422
        %426 = vset.pattern.permute.xlu0 0
        %427 = vperm.xlu0 %426, %v417
        %v428 = vpop.permute.xlu0 %427
        %431 = vset.pattern.permute.xlu0 0
        %432 = vperm.xlu0 %431, %v418
        %v433 = vpop.permute.xlu0 %432
        %436 = vset.pattern.permute.xlu0 0
        %437 = vperm.xlu0 %436, %v419
        %v438 = vpop.permute.xlu0 %437
        %vm440 = vcmask 130048
        %v442 = vsel %vm440, %v412, 0
        %v445 = vsel %vm440, %v413, 0
        %v448 = vsel %vm440, %v414, 0
        %v451 = vsel %vm440, %v415, 0
        %453 = vmatprep.subr.mxu0 %v409
        %454 = vmatpush1.msra.mxu0 %v408
        %455 = vmatprep.subr.mxu0 %v411
        %456 = vmatpush1.msra.mxu0 %v410
        %457 = vmatprep.subr.mxu0 0.0
        %458 = vmatpush1.msra.mxu0 0.0
        %459 = vmatprep.subr.mxu0 0.0
        %460 = vmatpush1.msra.mxu0 0.0
        %461 = vmatprep.subr.mxu0 0.0
        %462 = vmatpush1.msra.mxu0 0.0
        %463 = vmatprep.subr.mxu0 0.0
        %464 = vmatpush1.msra.mxu0 0.0
        %465 = vmatprep.subr.mxu0 0.0
        %466 = vmatpush1.msra.mxu0 0.0
        %467 = vmatprep.subr.mxu0 0.0
        %468 = vmatpush1.msra.mxu0 0.0
        %469 = vmatprep.subr.mxu0 0.0
        %470 = vmatpush1.msra.mxu0 0.0
        %471 = vmatprep.subr.mxu0 0.0
        %472 = vmatpush1.msra.mxu0 0.0
        %473 = vmatprep.subr.mxu0 0.0
        %474 = vmatpush1.msra.mxu0 0.0
        %475 = vmatprep.subr.mxu0 0.0
        %476 = vmatpush1.msra.mxu0 0.0
        %477 = vmatprep.subr.mxu0 0.0
        %478 = vmatpush1.msra.mxu0 0.0
        %479 = vmatprep.subr.mxu0 0.0
        %480 = vmatpush1.msra.mxu0 0.0
        %481 = vmatprep.subr.mxu0 0.0
        %482 = vmatpush1.msra.mxu0 0.0
        %483 = vmatprep.subr.mxu0 0.0
        %484 = vmatpush1.msra.mxu0 0.0
        %485 = vmatprep.subr.mxu0 0.0
        %486 = vmatpush1.msra.mxu0 0.0
        %487 = vmatprep.subr.mxu0 0.0
        %488 = vmatpush1.msra.mxu0 0.0
        %489 = vmatprep.subr.mxu0 0.0
        %490 = vmatpush1.msra.mxu0 0.0
        %491 = vmatprep.subr.mxu0 0.0
        %492 = vmatpush1.msra.mxu0 0.0
        %493 = vmatprep.subr.mxu0 0.0
        %494 = vmatpush1.msra.mxu0 0.0
        %495 = vmatprep.subr.mxu0 0.0
        %496 = vmatpush1.msra.mxu0 0.0
        %497 = vmatprep.subr.mxu0 0.0
        %498 = vmatpush1.msra.mxu0 0.0
        %499 = vmatprep.subr.mxu0 0.0
        %500 = vmatpush1.msra.mxu0 0.0
        %501 = vmatprep.subr.mxu0 0.0
        %502 = vmatpush1.msra.mxu0 0.0
        %503 = vmatprep.subr.mxu0 0.0
        %504 = vmatpush1.msra.mxu0 0.0
        %505 = vmatprep.subr.mxu0 0.0
        %506 = vmatpush1.msra.mxu0 0.0
        %507 = vmatprep.subr.mxu0 0.0
        %508 = vmatpush1.msra.mxu0 0.0
        %509 = vmatprep.subr.mxu0 0.0
        %510 = vmatpush1.msra.mxu0 0.0
        %511 = vmatprep.subr.mxu0 0.0
        %512 = vmatpush1.msra.mxu0 0.0
        %513 = vmatprep.subr.mxu0 0.0
        %514 = vmatpush1.msra.mxu0 0.0
        %515 = vmatprep.subr.mxu0 0.0
        %516 = vmatpush1.msra.mxu0 0.0
        %517 = vmatprep.mubr.f32.mxu0 0.0
        %518 = vmatmul.mubr.f32.gmra.mrb[0].mxu0 %v442
        %v519 = vpop.f32.mrb[0].mxu0
        %v520 = vadd.f32 %v423, %v519
        %v521 = vpop.f32.mrb[0].mxu0
        %v522 = vadd.f32 %v423, %v521
        %523 = vmatprep.mubr.f32.mxu0 0.0
        %524 = vmatmul.mubr.f32.gmra.mrb[0].mxu0 %v445
        %v525 = vpop.f32.mrb[0].mxu0
        %v526 = vadd.f32 %v428, %v525
        %v527 = vpop.f32.mrb[0].mxu0
        %v528 = vadd.f32 %v428, %v527
        %529 = vmatprep.mubr.f32.mxu0 0.0
        %530 = vmatmul.mubr.f32.gmra.mrb[0].mxu0 %v448
        %v531 = vpop.f32.mrb[0].mxu0
        %v532 = vadd.f32 %v433, %v531
        %v533 = vpop.f32.mrb[0].mxu0
        %v534 = vadd.f32 %v433, %v533
        %535 = vmatprep.mubr.f32.mxu0 0.0
        %536 = vmatmul.mubr.f32.gmra.mrb[0].mxu0 %v451
        %v537 = vpop.f32.mrb[0].mxu0
        %v538 = vadd.f32 %v438, %v537
        %v539 = vpop.f32.mrb[0].mxu0
        %v540 = vadd.f32 %v438, %v539
        %541 = vdwg.mxu0
        %v542 = vmul.f32 %v520, 0.5
        %v543 = vmul.f32 %v522, 0.5
        %v544 = vmul.f32 %v526, 0.5
        %v545 = vmul.f32 %v528, 0.5
        %v546 = vmul.f32 %v532, 0.5
        %v547 = vmul.f32 %v534, 0.5
        %v548 = vmul.f32 %v538, 0.5
        %v549 = vmul.f32 %v540, 0.5
        %v550 = vmul.f32 %v520, 0.70710677
        %v551 = vmul.f32 %v522, 0.70710677
        %v552 = vmul.f32 %v526, 0.70710677
        %v553 = vmul.f32 %v528, 0.70710677
        %v554 = vmul.f32 %v532, 0.70710677
        %v555 = vmul.f32 %v534, 0.70710677
        %v556 = vmul.f32 %v538, 0.70710677
        %v557 = vmul.f32 %v540, 0.70710677
        %v558 = vand.u32 2147483647, %v550
        %v559 = vand.u32 2147483647, %v551
        %v560 = vand.u32 2147483647, %v552
        %v561 = vand.u32 2147483647, %v553
        %v562 = vand.u32 2147483647, %v554
        %v563 = vand.u32 2147483647, %v555
        %v564 = vand.u32 2147483647, %v556
        %v565 = vand.u32 2147483647, %v557
        %v566 = vmul.f32 %v558, 0.3275911
        %v567 = vmul.f32 %v559, 0.3275911
        %v568 = vmul.f32 %v560, 0.3275911
        %v569 = vmul.f32 %v561, 0.3275911
        %v570 = vmul.f32 %v562, 0.3275911
        %v571 = vmul.f32 %v563, 0.3275911
        %v572 = vmul.f32 %v564, 0.3275911
        %v573 = vmul.f32 %v565, 0.3275911
        %v574 = vadd.f32 %v566, 1.0
        %v575 = vadd.f32 %v567, 1.0
        %v576 = vadd.f32 %v568, 1.0
        %v577 = vadd.f32 %v569, 1.0
        %v578 = vadd.f32 %v570, 1.0
        %v579 = vadd.f32 %v571, 1.0
        %v580 = vadd.f32 %v572, 1.0
        %v581 = vadd.f32 %v573, 1.0
        %v582 = vrcp.pop %v574
        %v583 = vmul.f32 1.0, %v582
        %v584 = vrcp.pop %v575
        %v585 = vmul.f32 1.0, %v584
        %v586 = vrcp.pop %v576
        %v587 = vmul.f32 1.0, %v586
        %v588 = vrcp.pop %v577
        %v589 = vmul.f32 1.0, %v588
        %v590 = vrcp.pop %v578
        %v591 = vmul.f32 1.0, %v590
        %v592 = vrcp.pop %v579
        %v593 = vmul.f32 1.0, %v592
        %v594 = vrcp.pop %v580
        %v595 = vmul.f32 1.0, %v594
        %v596 = vrcp.pop %v581
        %v597 = vmul.f32 1.0, %v596
        %v598 = vmul.f32 %v583, 1.0614054
        %v599 = vmul.f32 %v585, 1.0614054
        %v600 = vmul.f32 %v587, 1.0614054
        %v601 = vmul.f32 %v589, 1.0614054
        %v602 = vmul.f32 %v591, 1.0614054
        %v603 = vmul.f32 %v593, 1.0614054
        %v604 = vmul.f32 %v595, 1.0614054
        %v605 = vmul.f32 %v597, 1.0614054
        %v606 = vadd.f32 %v598, -1.4531521
        %v607 = vadd.f32 %v599, -1.4531521
        %v608 = vadd.f32 %v600, -1.4531521
        %v609 = vadd.f32 %v601, -1.4531521
        %v610 = vadd.f32 %v602, -1.4531521
        %v611 = vadd.f32 %v603, -1.4531521
        %v612 = vadd.f32 %v604, -1.4531521
        %v613 = vadd.f32 %v605, -1.4531521
        %v614 = vmul.f32 %v606, %v583
        %v615 = vmul.f32 %v607, %v585
        %v616 = vmul.f32 %v608, %v587
        %v617 = vmul.f32 %v609, %v589
        %v618 = vmul.f32 %v610, %v591
        %v619 = vmul.f32 %v611, %v593
        %v620 = vmul.f32 %v612, %v595
        %v621 = vmul.f32 %v613, %v597
        %v622 = vadd.f32 %v614, 1.4214138
        %v623 = vadd.f32 %v615, 1.4214138
        %v624 = vadd.f32 %v616, 1.4214138
        %v625 = vadd.f32 %v617, 1.4214138
        %v626 = vadd.f32 %v618, 1.4214138
        %v627 = vadd.f32 %v619, 1.4214138
        %v628 = vadd.f32 %v620, 1.4214138
        %v629 = vadd.f32 %v621, 1.4214138
        %v630 = vmul.f32 %v622, %v583
        %v631 = vmul.f32 %v623, %v585
        %v632 = vmul.f32 %v624, %v587
        %v633 = vmul.f32 %v625, %v589
        %v634 = vmul.f32 %v626, %v591
        %v635 = vmul.f32 %v627, %v593
        %v636 = vmul.f32 %v628, %v595
        %v637 = vmul.f32 %v629, %v597
        %v638 = vadd.f32 %v630, -0.28449672
        %v639 = vadd.f32 %v631, -0.28449672
        %v640 = vadd.f32 %v632, -0.28449672
        %v641 = vadd.f32 %v633, -0.28449672
        %v642 = vadd.f32 %v634, -0.28449672
        %v643 = vadd.f32 %v635, -0.28449672
        %v644 = vadd.f32 %v636, -0.28449672
        %v645 = vadd.f32 %v637, -0.28449672
        %v646 = vmul.f32 %v638, %v583
        %v647 = vmul.f32 %v639, %v585
        %v648 = vmul.f32 %v640, %v587
        %v649 = vmul.f32 %v641, %v589
        %v650 = vmul.f32 %v642, %v591
        %v651 = vmul.f32 %v643, %v593
        %v652 = vmul.f32 %v644, %v595
        %v653 = vmul.f32 %v645, %v597
        %v654 = vadd.f32 %v646, 0.2548296
        %v655 = vadd.f32 %v647, 0.2548296
        %v656 = vadd.f32 %v648, 0.2548296
        %v657 = vadd.f32 %v649, 0.2548296
        %v658 = vadd.f32 %v650, 0.2548296
        %v659 = vadd.f32 %v651, 0.2548296
        %v660 = vadd.f32 %v652, 0.2548296
        %v661 = vadd.f32 %v653, 0.2548296
        %v662 = vmul.f32 %v654, %v583
        %v663 = vmul.f32 %v655, %v585
        %v664 = vmul.f32 %v656, %v587
        %v665 = vmul.f32 %v657, %v589
        %v666 = vmul.f32 %v658, %v591
        %v667 = vmul.f32 %v659, %v593
        %v668 = vmul.f32 %v660, %v595
        %v669 = vmul.f32 %v661, %v597
        %v670 = vsub.f32 0.0, %v558
        %v671 = vsub.f32 0.0, %v559
        %v672 = vsub.f32 0.0, %v560
        %v673 = vsub.f32 0.0, %v561
        %v674 = vsub.f32 0.0, %v562
        %v675 = vsub.f32 0.0, %v563
        %v676 = vsub.f32 0.0, %v564
        %v677 = vsub.f32 0.0, %v565
        %v678 = vmul.f32 %v670, %v558
        %v679 = vmul.f32 %v671, %v559
        %v680 = vmul.f32 %v672, %v560
        %v681 = vmul.f32 %v673, %v561
        %v682 = vmul.f32 %v674, %v562
        %v683 = vmul.f32 %v675, %v563
        %v684 = vmul.f32 %v676, %v564
        %v685 = vmul.f32 %v677, %v565
        %v686 = vmul.f32 %v678, 1.442695
        %v687 = vpow.pop %v686
        %v688 = vmul.f32 %v679, 1.442695
        %v689 = vpow.pop %v688
        %v690 = vmul.f32 %v680, 1.442695
        %v691 = vpow.pop %v690
        %v692 = vmul.f32 %v681, 1.442695
        %v693 = vpow.pop %v692
        %v694 = vmul.f32 %v682, 1.442695
        %v695 = vpow.pop %v694
        %v696 = vmul.f32 %v683, 1.442695
        %v697 = vpow.pop %v696
        %v698 = vmul.f32 %v684, 1.442695
        %v699 = vpow.pop %v698
        %v700 = vmul.f32 %v685, 1.442695
        %v701 = vpow.pop %v700
        %v702 = vmul.f32 %v662, %v687
        %v703 = vmul.f32 %v663, %v689
        %v704 = vmul.f32 %v664, %v691
        %v705 = vmul.f32 %v665, %v693
        %v706 = vmul.f32 %v666, %v695
        %v707 = vmul.f32 %v667, %v697
        %v708 = vmul.f32 %v668, %v699
        %v709 = vmul.f32 %v669, %v701
        %v710 = vsub.f32 1.0, %v702
        %v711 = vsub.f32 1.0, %v703
        %v712 = vsub.f32 1.0, %v704
        %v713 = vsub.f32 1.0, %v705
        %v714 = vsub.f32 1.0, %v706
        %v715 = vsub.f32 1.0, %v707
        %v716 = vsub.f32 1.0, %v708
        %v717 = vsub.f32 1.0, %v709
        %vm718 = vcmp.ge.f32.partialorder %v550, 0.0
        %vm719 = vcmp.ge.f32.partialorder %v551, 0.0
        %vm720 = vcmp.ge.f32.partialorder %v552, 0.0
        %vm721 = vcmp.ge.f32.partialorder %v553, 0.0
        %vm722 = vcmp.ge.f32.partialorder %v554, 0.0
        %vm723 = vcmp.ge.f32.partialorder %v555, 0.0
        %vm724 = vcmp.ge.f32.partialorder %v556, 0.0
        %vm725 = vcmp.ge.f32.partialorder %v557, 0.0
        %v726 = vsub.f32 0.0, %v710
        %v727 = vsub.f32 0.0, %v711
        %v728 = vsub.f32 0.0, %v712
        %v729 = vsub.f32 0.0, %v713
        %v730 = vsub.f32 0.0, %v714
        %v731 = vsub.f32 0.0, %v715
        %v732 = vsub.f32 0.0, %v716
        %v733 = vsub.f32 0.0, %v717
        %v734 = vsel %vm718, %v710, %v726
        %v735 = vsel %vm719, %v711, %v727
        %v736 = vsel %vm720, %v712, %v728
        %v737 = vsel %vm721, %v713, %v729
        %v738 = vsel %vm722, %v714, %v730
        %v739 = vsel %vm723, %v715, %v731
        %v740 = vsel %vm724, %v716, %v732
        %v741 = vsel %vm725, %v717, %v733
        %v742 = vadd.f32 %v734, 1.0
        %v743 = vadd.f32 %v735, 1.0
        %v744 = vadd.f32 %v736, 1.0
        %v745 = vadd.f32 %v737, 1.0
        %v746 = vadd.f32 %v738, 1.0
        %v747 = vadd.f32 %v739, 1.0
        %v748 = vadd.f32 %v740, 1.0
        %v749 = vadd.f32 %v741, 1.0
        %v750 = vmul.f32 %v542, %v742
        %v751 = vmul.f32 %v543, %v743
        %v752 = vmul.f32 %v544, %v744
        %v753 = vmul.f32 %v545, %v745
        %v754 = vmul.f32 %v546, %v746
        %v755 = vmul.f32 %v547, %v747
        %v756 = vmul.f32 %v548, %v748
        %v757 = vmul.f32 %v549, %v749
        %v758 = vadd.f32 %v750, %v752
        %v759 = vadd.f32 %v758, %v754
        %v760 = vadd.f32 %v759, %v756
        %v761 = vrot.slane %v760, 4
        %v762 = vadd.f32 %v760, %v761
        %v763 = vrot.slane %v762, 2
        %v764 = vadd.f32 %v762, %v763
        %v765 = vrot.slane %v764, 1
        %v766 = vadd.f32 %v764, %v765
        %v767 = vadd.f32 %v751, %v753
        %v768 = vadd.f32 %v767, %v755
        %v769 = vadd.f32 %v768, %v757
        %v770 = vrot.slane %v769, 4
        %v771 = vadd.f32 %v769, %v770
        %v772 = vrot.slane %v771, 2
        %v773 = vadd.f32 %v771, %v772
        %v774 = vrot.slane %v773, 1
        %v775 = vadd.f32 %v773, %v774
        %v776 = vrcp.pop 32.0
        %v777 = vmul.f32 %v766, %v776
        %v778 = vmul.f32 %v775, %v776
        %v779 = vsub.f32 %v750, %v777
        %v780 = vsub.f32 %v751, %v778
        %v781 = vsub.f32 %v752, %v777
        %v782 = vsub.f32 %v753, %v778
        %v783 = vsub.f32 %v754, %v777
        %v784 = vsub.f32 %v755, %v778
        %v785 = vsub.f32 %v756, %v777
        %v786 = vsub.f32 %v757, %v778
        %v787 = vmul.f32 %v779, %v779
        %v788 = vmul.f32 %v780, %v780
        %v789 = vmul.f32 %v781, %v781
        %v790 = vmul.f32 %v782, %v782
        %v791 = vmul.f32 %v783, %v783
        %v792 = vmul.f32 %v784, %v784
        %v793 = vmul.f32 %v785, %v785
        %v794 = vmul.f32 %v786, %v786
        %v795 = vadd.f32 %v787, %v789
        %v796 = vadd.f32 %v795, %v791
        %v797 = vadd.f32 %v796, %v793
        %v798 = vrot.slane %v797, 4
        %v799 = vadd.f32 %v797, %v798
        %v800 = vrot.slane %v799, 2
        %v801 = vadd.f32 %v799, %v800
        %v802 = vrot.slane %v801, 1
        %v803 = vadd.f32 %v801, %v802
        %v804 = vadd.f32 %v788, %v790
        %v805 = vadd.f32 %v804, %v792
        %v806 = vadd.f32 %v805, %v794
        %v807 = vrot.slane %v806, 4
        %v808 = vadd.f32 %v806, %v807
        %v809 = vrot.slane %v808, 2
        %v810 = vadd.f32 %v808, %v809
        %v811 = vrot.slane %v810, 1
        %v812 = vadd.f32 %v810, %v811
        %v813 = vmul.f32 %v803, %v776
        %v814 = vmul.f32 %v812, %v776
        %v815 = vadd.f32 %v813, 1e-05
        %v816 = vadd.f32 %v814, 1e-05
        %v817 = vrsqrt.pop %v815
        %v818 = vrsqrt.pop %v816
        %v819 = vmul.f32 %v779, %v817
        %v820 = vmul.f32 %v780, %v818
        %v821 = vmul.f32 %v781, %v817
        %v822 = vmul.f32 %v782, %v818
        %v823 = vmul.f32 %v783, %v817
        %v824 = vmul.f32 %v784, %v818
        %v825 = vmul.f32 %v785, %v817
        %v826 = vmul.f32 %v786, %v818
        %v827 = vld [vmem:[%s5] sm:$0xff]
        %v828 = vld [vmem:[%s5 + $0x8] sm:$0xff]
        %v829 = vld [vmem:[%s5 + $0x10] sm:$0xff]
        %v830 = vld [vmem:[%s5 + $0x18] sm:$0xff]
        %v831 = vld [vmem:[%s6] sm:$0x1]
        %v833 = vlaneseq
        %v834 = vshrl.u32 %v833, 7
        %v835 = vsub.s32 0, %v834
        %v836 = vrot.slane %v831, %v835
        %838 = vxpose.xlu0.b32.start [1/16] %v819, 128
        %839 = vxpose.xlu0.b32.cont [2/16] %v821, 128
        %840 = vxpose.xlu0.b32.cont [3/16] %v823, 128
        %841 = vxpose.xlu0.b32.cont [4/16] %v825, 128
        %842 = vxpose.xlu0.b32.cont [5/16] 0.0, 128
        %843 = vxpose.xlu0.b32.cont [6/16] 0.0, 128
        %844 = vxpose.xlu0.b32.cont [7/16] 0.0, 128
        %845 = vxpose.xlu0.b32.cont [8/16] 0.0, 128
        %846 = vxpose.xlu0.b32.cont [9/16] 0.0, 128
        %847 = vxpose.xlu0.b32.cont [10/16] 0.0, 128
        %848 = vxpose.xlu0.b32.cont [11/16] 0.0, 128
        %849 = vxpose.xlu0.b32.cont [12/16] 0.0, 128
        %850 = vxpose.xlu0.b32.cont [13/16] 0.0, 128
        %851 = vxpose.xlu0.b32.cont [14/16] 0.0, 128
        %852 = vxpose.xlu0.b32.cont [15/16] 0.0, 128
        %853 = vxpose.xlu0.b32.end [16/16] 0.0, 128
        %v854 = vpop.trf.xlu0
        %v855 = vpop.trf.xlu0
        %v856 = vpop.trf.xlu0
        %v857 = vpop.trf.xlu0
        %v858 = vpop.trf.xlu0
        %v859 = vpop.trf.xlu0
        %v860 = vpop.trf.xlu0
        %v861 = vpop.trf.xlu0
        %v862 = vpop.trf.xlu0
        %v863 = vpop.trf.xlu0
        %v864 = vpop.trf.xlu0
        %v865 = vpop.trf.xlu0
        %v866 = vpop.trf.xlu0
        %v867 = vpop.trf.xlu0
        %v868 = vpop.trf.xlu0
        %v869 = vpop.trf.xlu0
        %870 = vxpose.xlu0.b32.start [1/16] %v820, 128
        %871 = vxpose.xlu0.b32.cont [2/16] %v822, 128
        %872 = vxpose.xlu0.b32.cont [3/16] %v824, 128
        %873 = vxpose.xlu0.b32.cont [4/16] %v826, 128
        %874 = vxpose.xlu0.b32.cont [5/16] 0.0, 128
        %875 = vxpose.xlu0.b32.cont [6/16] 0.0, 128
        %876 = vxpose.xlu0.b32.cont [7/16] 0.0, 128
        %877 = vxpose.xlu0.b32.cont [8/16] 0.0, 128
        %878 = vxpose.xlu0.b32.cont [9/16] 0.0, 128
        %879 = vxpose.xlu0.b32.cont [10/16] 0.0, 128
        %880 = vxpose.xlu0.b32.cont [11/16] 0.0, 128
        %881 = vxpose.xlu0.b32.cont [12/16] 0.0, 128
        %882 = vxpose.xlu0.b32.cont [13/16] 0.0, 128
        %883 = vxpose.xlu0.b32.cont [14/16] 0.0, 128
        %884 = vxpose.xlu0.b32.cont [15/16] 0.0, 128
        %885 = vxpose.xlu0.b32.end [16/16] 0.0, 128
        %v886 = vpop.trf.xlu0
        %v887 = vpop.trf.xlu0
        %v888 = vpop.trf.xlu0
        %v889 = vpop.trf.xlu0
        %v890 = vpop.trf.xlu0
        %v891 = vpop.trf.xlu0
        %v892 = vpop.trf.xlu0
        %v893 = vpop.trf.xlu0
        %v894 = vpop.trf.xlu0
        %v895 = vpop.trf.xlu0
        %v896 = vpop.trf.xlu0
        %v897 = vpop.trf.xlu0
        %v898 = vpop.trf.xlu0
        %v899 = vpop.trf.xlu0
        %v900 = vpop.trf.xlu0
        %v901 = vpop.trf.xlu0
        %vm902 = vcmask 261120
        %v904 = vsel %vm902, %v854, 0
        %v907 = vsel %vm902, %v855, 0
        %v910 = vsel %vm902, %v856, 0
        %v913 = vsel %vm902, %v857, 0
        %v916 = vsel %vm902, %v858, 0
        %v919 = vsel %vm902, %v859, 0
        %v922 = vsel %vm902, %v860, 0
        %v925 = vsel %vm902, %v861, 0
        %v928 = vsel %vm902, %v862, 0
        %v931 = vsel %vm902, %v863, 0
        %v934 = vsel %vm902, %v864, 0
        %v937 = vsel %vm902, %v865, 0
        %v940 = vsel %vm902, %v866, 0
        %v943 = vsel %vm902, %v867, 0
        %v946 = vsel %vm902, %v868, 0
        %v949 = vsel %vm902, %v869, 0
        %v952 = vsel %vm902, %v886, 0
        %v955 = vsel %vm902, %v887, 0
        %v958 = vsel %vm902, %v888, 0
        %v961 = vsel %vm902, %v889, 0
        %v964 = vsel %vm902, %v890, 0
        %v967 = vsel %vm902, %v891, 0
        %v970 = vsel %vm902, %v892, 0
        %v973 = vsel %vm902, %v893, 0
        %v976 = vsel %vm902, %v894, 0
        %v979 = vsel %vm902, %v895, 0
        %v982 = vsel %vm902, %v896, 0
        %v985 = vsel %vm902, %v897, 0
        %v988 = vsel %vm902, %v898, 0
        %v991 = vsel %vm902, %v899, 0
        %v994 = vsel %vm902, %v900, 0
        %v997 = vsel %vm902, %v901, 0
        %999 = vmatprep.subr.mxu0 0.0
        %1000 = vmatpush1.msra.mxu0 %v827
        %1001 = vmatprep.subr.mxu0 0.0
        %1002 = vmatpush1.msra.mxu0 %v828
        %1003 = vmatprep.subr.mxu0 0.0
        %1004 = vmatpush1.msra.mxu0 %v829
        %1005 = vmatprep.subr.mxu0 0.0
        %1006 = vmatpush1.msra.mxu0 %v830
        %1007 = vmatprep.subr.mxu0 0.0
        %1008 = vmatpush1.msra.mxu0 0.0
        %1009 = vmatprep.subr.mxu0 0.0
        %1010 = vmatpush1.msra.mxu0 0.0
        %1011 = vmatprep.subr.mxu0 0.0
        %1012 = vmatpush1.msra.mxu0 0.0
        %1013 = vmatprep.subr.mxu0 0.0
        %1014 = vmatpush1.msra.mxu0 0.0
        %1015 = vmatprep.subr.mxu0 0.0
        %1016 = vmatpush1.msra.mxu0 0.0
        %1017 = vmatprep.subr.mxu0 0.0
        %1018 = vmatpush1.msra.mxu0 0.0
        %1019 = vmatprep.subr.mxu0 0.0
        %1020 = vmatpush1.msra.mxu0 0.0
        %1021 = vmatprep.subr.mxu0 0.0
        %1022 = vmatpush1.msra.mxu0 0.0
        %1023 = vmatprep.subr.mxu0 0.0
        %1024 = vmatpush1.msra.mxu0 0.0
        %1025 = vmatprep.subr.mxu0 0.0
        %1026 = vmatpush1.msra.mxu0 0.0
        %1027 = vmatprep.subr.mxu0 0.0
        %1028 = vmatpush1.msra.mxu0 0.0
        %1029 = vmatprep.subr.mxu0 0.0
        %1030 = vmatpush1.msra.mxu0 0.0
        %1031 = vmatprep.subr.mxu0 0.0
        %1032 = vmatpush1.msra.mxu0 0.0
        %1033 = vmatprep.subr.mxu0 0.0
        %1034 = vmatpush1.msra.mxu0 0.0
        %1035 = vmatprep.subr.mxu0 0.0
        %1036 = vmatpush1.msra.mxu0 0.0
        %1037 = vmatprep.subr.mxu0 0.0
        %1038 = vmatpush1.msra.mxu0 0.0
        %1039 = vmatprep.subr.mxu0 0.0
        %1040 = vmatpush1.msra.mxu0 0.0
        %1041 = vmatprep.subr.mxu0 0.0
        %1042 = vmatpush1.msra.mxu0 0.0
        %1043 = vmatprep.subr.mxu0 0.0
        %1044 = vmatpush1.msra.mxu0 0.0
        %1045 = vmatprep.subr.mxu0 0.0
        %1046 = vmatpush1.msra.mxu0 0.0
        %1047 = vmatprep.subr.mxu0 0.0
        %1048 = vmatpush1.msra.mxu0 0.0
        %1049 = vmatprep.subr.mxu0 0.0
        %1050 = vmatpush1.msra.mxu0 0.0
        %1051 = vmatprep.subr.mxu0 0.0
        %1052 = vmatpush1.msra.mxu0 0.0
        %1053 = vmatprep.subr.mxu0 0.0
        %1054 = vmatpush1.msra.mxu0 0.0
        %1055 = vmatprep.subr.mxu0 0.0
        %1056 = vmatpush1.msra.mxu0 0.0
        %1057 = vmatprep.subr.mxu0 0.0
        %1058 = vmatpush1.msra.mxu0 0.0
        %1059 = vmatprep.subr.mxu0 0.0
        %1060 = vmatpush1.msra.mxu0 0.0
        %1061 = vmatprep.subr.mxu0 0.0
        %1062 = vmatpush1.msra.mxu0 0.0
        %1063 = vmatprep.mubr.f32.mxu0 0.0
        %1064 = vmatmul.mubr.f32.gmra.mrb[0].mxu0 %v904
        %v1065 = vpop.f32.mrb[0].mxu0
        %v1066 = vadd.f32 %v836, %v1065
        %v1067 = vpop.f32.mrb[0].mxu0
        %1068 = vmatprep.mubr.f32.mxu0 0.0
        %1069 = vmatmul.mubr.f32.gmra.mrb[0].mxu0 %v907
        %v1070 = vpop.f32.mrb[0].mxu0
        %v1071 = vadd.f32 %v836, %v1070
        %v1072 = vpop.f32.mrb[0].mxu0
        %1073 = vmatprep.mubr.f32.mxu0 0.0
        %1074 = vmatmul.mubr.f32.gmra.mrb[0].mxu0 %v910
        %v1075 = vpop.f32.mrb[0].mxu0
        %v1076 = vadd.f32 %v836, %v1075
        %v1077 = vpop.f32.mrb[0].mxu0
        %1078 = vmatprep.mubr.f32.mxu0 0.0
        %1079 = vmatmul.mubr.f32.gmra.mrb[0].mxu0 %v913
        %v1080 = vpop.f32.mrb[0].mxu0
        %v1081 = vadd.f32 %v836, %v1080
        %v1082 = vpop.f32.mrb[0].mxu0
        %1083 = vmatprep.mubr.f32.mxu0 0.0
        %1084 = vmatmul.mubr.f32.gmra.mrb[0].mxu0 %v916
        %v1085 = vpop.f32.mrb[0].mxu0
        %v1086 = vadd.f32 %v836, %v1085
        %v1087 = vpop.f32.mrb[0].mxu0
        %1088 = vmatprep.mubr.f32.mxu0 0.0
        %1089 = vmatmul.mubr.f32.gmra.mrb[0].mxu0 %v919
        %v1090 = vpop.f32.mrb[0].mxu0
        %v1091 = vadd.f32 %v836, %v1090
        %v1092 = vpop.f32.mrb[0].mxu0
        %1093 = vmatprep.mubr.f32.mxu0 0.0
        %1094 = vmatmul.mubr.f32.gmra.mrb[0].mxu0 %v922
        %v1095 = vpop.f32.mrb[0].mxu0
        %v1096 = vadd.f32 %v836, %v1095
        %v1097 = vpop.f32.mrb[0].mxu0
        %1098 = vmatprep.mubr.f32.mxu0 0.0
        %1099 = vmatmul.mubr.f32.gmra.mrb[0].mxu0 %v925
        %v1100 = vpop.f32.mrb[0].mxu0
        %v1101 = vadd.f32 %v836, %v1100
        %v1102 = vpop.f32.mrb[0].mxu0
        %1103 = vmatprep.mubr.f32.mxu0 0.0
        %1104 = vmatmul.mubr.f32.gmra.mrb[0].mxu0 %v928
        %v1105 = vpop.f32.mrb[0].mxu0
        %v1106 = vadd.f32 %v836, %v1105
        %v1107 = vpop.f32.mrb[0].mxu0
        %1108 = vmatprep.mubr.f32.mxu0 0.0
        %1109 = vmatmul.mubr.f32.gmra.mrb[0].mxu0 %v931
        %v1110 = vpop.f32.mrb[0].mxu0
        %v1111 = vadd.f32 %v836, %v1110
        %v1112 = vpop.f32.mrb[0].mxu0
        %1113 = vmatprep.mubr.f32.mxu0 0.0
        %1114 = vmatmul.mubr.f32.gmra.mrb[0].mxu0 %v934
        %v1115 = vpop.f32.mrb[0].mxu0
        %v1116 = vadd.f32 %v836, %v1115
        %v1117 = vpop.f32.mrb[0].mxu0
        %1118 = vmatprep.mubr.f32.mxu0 0.0
        %1119 = vmatmul.mubr.f32.gmra.mrb[0].mxu0 %v937
        %v1120 = vpop.f32.mrb[0].mxu0
        %v1121 = vadd.f32 %v836, %v1120
        %v1122 = vpop.f32.mrb[0].mxu0
        %1123 = vmatprep.mubr.f32.mxu0 0.0
        %1124 = vmatmul.mubr.f32.gmra.mrb[0].mxu0 %v940
        %v1125 = vpop.f32.mrb[0].mxu0
        %v1126 = vadd.f32 %v836, %v1125
        %v1127 = vpop.f32.mrb[0].mxu0
        %1128 = vmatprep.mubr.f32.mxu0 0.0
        %1129 = vmatmul.mubr.f32.gmra.mrb[0].mxu0 %v943
        %v1130 = vpop.f32.mrb[0].mxu0
        %v1131 = vadd.f32 %v836, %v1130
        %v1132 = vpop.f32.mrb[0].mxu0
        %1133 = vmatprep.mubr.f32.mxu0 0.0
        %1134 = vmatmul.mubr.f32.gmra.mrb[0].mxu0 %v946
        %v1135 = vpop.f32.mrb[0].mxu0
        %v1136 = vadd.f32 %v836, %v1135
        %v1137 = vpop.f32.mrb[0].mxu0
        %1138 = vmatprep.mubr.f32.mxu0 0.0
        %1139 = vmatmul.mubr.f32.gmra.mrb[0].mxu0 %v949
        %v1140 = vpop.f32.mrb[0].mxu0
        %v1141 = vadd.f32 %v836, %v1140
        %v1142 = vpop.f32.mrb[0].mxu0
        %1143 = vmatprep.mubr.f32.mxu0 0.0
        %1144 = vmatmul.mubr.f32.gmra.mrb[0].mxu0 %v952
        %v1145 = vpop.f32.mrb[0].mxu0
        %v1146 = vadd.f32 %v836, %v1145
        %v1147 = vpop.f32.mrb[0].mxu0
        %1148 = vmatprep.mubr.f32.mxu0 0.0
        %1149 = vmatmul.mubr.f32.gmra.mrb[0].mxu0 %v955
        %v1150 = vpop.f32.mrb[0].mxu0
        %v1151 = vadd.f32 %v836, %v1150
        %v1152 = vpop.f32.mrb[0].mxu0
        %1153 = vmatprep.mubr.f32.mxu0 0.0
        %1154 = vmatmul.mubr.f32.gmra.mrb[0].mxu0 %v958
        %v1155 = vpop.f32.mrb[0].mxu0
        %v1156 = vadd.f32 %v836, %v1155
        %v1157 = vpop.f32.mrb[0].mxu0
        %1158 = vmatprep.mubr.f32.mxu0 0.0
        %1159 = vmatmul.mubr.f32.gmra.mrb[0].mxu0 %v961
        %v1160 = vpop.f32.mrb[0].mxu0
        %v1161 = vadd.f32 %v836, %v1160
        %v1162 = vpop.f32.mrb[0].mxu0
        %1163 = vmatprep.mubr.f32.mxu0 0.0
        %1164 = vmatmul.mubr.f32.gmra.mrb[0].mxu0 %v964
        %v1165 = vpop.f32.mrb[0].mxu0
        %v1166 = vadd.f32 %v836, %v1165
        %v1167 = vpop.f32.mrb[0].mxu0
        %1168 = vmatprep.mubr.f32.mxu0 0.0
        %1169 = vmatmul.mubr.f32.gmra.mrb[0].mxu0 %v967
        %v1170 = vpop.f32.mrb[0].mxu0
        %v1171 = vadd.f32 %v836, %v1170
        %v1172 = vpop.f32.mrb[0].mxu0
        %1173 = vmatprep.mubr.f32.mxu0 0.0
        %1174 = vmatmul.mubr.f32.gmra.mrb[0].mxu0 %v970
        %v1175 = vpop.f32.mrb[0].mxu0
        %v1176 = vadd.f32 %v836, %v1175
        %v1177 = vpop.f32.mrb[0].mxu0
        %1178 = vmatprep.mubr.f32.mxu0 0.0
        %1179 = vmatmul.mubr.f32.gmra.mrb[0].mxu0 %v973
        %v1180 = vpop.f32.mrb[0].mxu0
        %v1181 = vadd.f32 %v836, %v1180
        %v1182 = vpop.f32.mrb[0].mxu0
        %1183 = vmatprep.mubr.f32.mxu0 0.0
        %1184 = vmatmul.mubr.f32.gmra.mrb[0].mxu0 %v976
        %v1185 = vpop.f32.mrb[0].mxu0
        %v1186 = vadd.f32 %v836, %v1185
        %v1187 = vpop.f32.mrb[0].mxu0
        %1188 = vmatprep.mubr.f32.mxu0 0.0
        %1189 = vmatmul.mubr.f32.gmra.mrb[0].mxu0 %v979
        %v1190 = vpop.f32.mrb[0].mxu0
        %v1191 = vadd.f32 %v836, %v1190
        %v1192 = vpop.f32.mrb[0].mxu0
        %1193 = vmatprep.mubr.f32.mxu0 0.0
        %1194 = vmatmul.mubr.f32.gmra.mrb[0].mxu0 %v982
        %v1195 = vpop.f32.mrb[0].mxu0
        %v1196 = vadd.f32 %v836, %v1195
        %v1197 = vpop.f32.mrb[0].mxu0
        %1198 = vmatprep.mubr.f32.mxu0 0.0
        %1199 = vmatmul.mubr.f32.gmra.mrb[0].mxu0 %v985
        %v1200 = vpop.f32.mrb[0].mxu0
        %v1201 = vadd.f32 %v836, %v1200
        %v1202 = vpop.f32.mrb[0].mxu0
        %1203 = vmatprep.mubr.f32.mxu0 0.0
        %1204 = vmatmul.mubr.f32.gmra.mrb[0].mxu0 %v988
        %v1205 = vpop.f32.mrb[0].mxu0
        %v1206 = vadd.f32 %v836, %v1205
        %v1207 = vpop.f32.mrb[0].mxu0
        %1208 = vmatprep.mubr.f32.mxu0 0.0
        %1209 = vmatmul.mubr.f32.gmra.mrb[0].mxu0 %v991
        %v1210 = vpop.f32.mrb[0].mxu0
        %v1211 = vadd.f32 %v836, %v1210
        %v1212 = vpop.f32.mrb[0].mxu0
        %1213 = vmatprep.mubr.f32.mxu0 0.0
        %1214 = vmatmul.mubr.f32.gmra.mrb[0].mxu0 %v994
        %v1215 = vpop.f32.mrb[0].mxu0
        %v1216 = vadd.f32 %v836, %v1215
        %v1217 = vpop.f32.mrb[0].mxu0
        %1218 = vmatprep.mubr.f32.mxu0 0.0
        %1219 = vmatmul.mubr.f32.gmra.mrb[0].mxu0 %v997
        %v1220 = vpop.f32.mrb[0].mxu0
        %v1221 = vadd.f32 %v836, %v1220
        %v1222 = vpop.f32.mrb[0].mxu0
        %1223 = vdwg.mxu0
        %v1224 = vmul.f32 %v1066, 0.5
        %v1225 = vmul.f32 %v1071, 0.5
        %v1226 = vmul.f32 %v1076, 0.5
        %v1227 = vmul.f32 %v1081, 0.5
        %v1228 = vmul.f32 %v1086, 0.5
        %v1229 = vmul.f32 %v1091, 0.5
        %v1230 = vmul.f32 %v1096, 0.5
        %v1231 = vmul.f32 %v1101, 0.5
        %v1232 = vmul.f32 %v1106, 0.5
        %v1233 = vmul.f32 %v1111, 0.5
        %v1234 = vmul.f32 %v1116, 0.5
        %v1235 = vmul.f32 %v1121, 0.5
        %v1236 = vmul.f32 %v1126, 0.5
        %v1237 = vmul.f32 %v1131, 0.5
        %v1238 = vmul.f32 %v1136, 0.5
        %v1239 = vmul.f32 %v1141, 0.5
        %v1240 = vmul.f32 %v1146, 0.5
        %v1241 = vmul.f32 %v1151, 0.5
        %v1242 = vmul.f32 %v1156, 0.5
        %v1243 = vmul.f32 %v1161, 0.5
        %v1244 = vmul.f32 %v1166, 0.5
        %v1245 = vmul.f32 %v1171, 0.5
        %v1246 = vmul.f32 %v1176, 0.5
        %v1247 = vmul.f32 %v1181, 0.5
        %v1248 = vmul.f32 %v1186, 0.5
        %v1249 = vmul.f32 %v1191, 0.5
        %v1250 = vmul.f32 %v1196, 0.5
        %v1251 = vmul.f32 %v1201, 0.5
        %v1252 = vmul.f32 %v1206, 0.5
        %v1253 = vmul.f32 %v1211, 0.5
        %v1254 = vmul.f32 %v1216, 0.5
        %v1255 = vmul.f32 %v1221, 0.5
        %v1256 = vmul.f32 %v1066, 0.70710677
        %v1257 = vmul.f32 %v1071, 0.70710677
        %v1258 = vmul.f32 %v1076, 0.70710677
        %v1259 = vmul.f32 %v1081, 0.70710677
        %v1260 = vmul.f32 %v1086, 0.70710677
        %v1261 = vmul.f32 %v1091, 0.70710677
        %v1262 = vmul.f32 %v1096, 0.70710677
        %v1263 = vmul.f32 %v1101, 0.70710677
        %v1264 = vmul.f32 %v1106, 0.70710677
        %v1265 = vmul.f32 %v1111, 0.70710677
        %v1266 = vmul.f32 %v1116, 0.70710677
        %v1267 = vmul.f32 %v1121, 0.70710677
        %v1268 = vmul.f32 %v1126, 0.70710677
        %v1269 = vmul.f32 %v1131, 0.70710677
        %v1270 = vmul.f32 %v1136, 0.70710677
        %v1271 = vmul.f32 %v1141, 0.70710677
        %v1272 = vmul.f32 %v1146, 0.70710677
        %v1273 = vmul.f32 %v1151, 0.70710677
        %v1274 = vmul.f32 %v1156, 0.70710677
        %v1275 = vmul.f32 %v1161, 0.70710677
        %v1276 = vmul.f32 %v1166, 0.70710677
        %v1277 = vmul.f32 %v1171, 0.70710677
        %v1278 = vmul.f32 %v1176, 0.70710677
        %v1279 = vmul.f32 %v1181, 0.70710677
        %v1280 = vmul.f32 %v1186, 0.70710677
        %v1281 = vmul.f32 %v1191, 0.70710677
        %v1282 = vmul.f32 %v1196, 0.70710677
        %v1283 = vmul.f32 %v1201, 0.70710677
        %v1284 = vmul.f32 %v1206, 0.70710677
        %v1285 = vmul.f32 %v1211, 0.70710677
        %v1286 = vmul.f32 %v1216, 0.70710677
        %v1287 = vmul.f32 %v1221, 0.70710677
        %v1288 = vand.u32 2147483647, %v1256
        %v1289 = vand.u32 2147483647, %v1257
        %v1290 = vand.u32 2147483647, %v1258
        %v1291 = vand.u32 2147483647, %v1259
        %v1292 = vand.u32 2147483647, %v1260
        %v1293 = vand.u32 2147483647, %v1261
        %v1294 = vand.u32 2147483647, %v1262
        %v1295 = vand.u32 2147483647, %v1263
        %v1296 = vand.u32 2147483647, %v1264
        %v1297 = vand.u32 2147483647, %v1265
        %v1298 = vand.u32 2147483647, %v1266
        %v1299 = vand.u32 2147483647, %v1267
        %v1300 = vand.u32 2147483647, %v1268
        %v1301 = vand.u32 2147483647, %v1269
        %v1302 = vand.u32 2147483647, %v1270
        %v1303 = vand.u32 2147483647, %v1271
        %v1304 = vand.u32 2147483647, %v1272
        %v1305 = vand.u32 2147483647, %v1273
        %v1306 = vand.u32 2147483647, %v1274
        %v1307 = vand.u32 2147483647, %v1275
        %v1308 = vand.u32 2147483647, %v1276
        %v1309 = vand.u32 2147483647, %v1277
        %v1310 = vand.u32 2147483647, %v1278
        %v1311 = vand.u32 2147483647, %v1279
        %v1312 = vand.u32 2147483647, %v1280
        %v1313 = vand.u32 2147483647, %v1281
        %v1314 = vand.u32 2147483647, %v1282
        %v1315 = vand.u32 2147483647, %v1283
        %v1316 = vand.u32 2147483647, %v1284
        %v1317 = vand.u32 2147483647, %v1285
        %v1318 = vand.u32 2147483647, %v1286
        %v1319 = vand.u32 2147483647, %v1287
        %v1320 = vmul.f32 %v1288, 0.3275911
        %v1321 = vmul.f32 %v1289, 0.3275911
        %v1322 = vmul.f32 %v1290, 0.3275911
        %v1323 = vmul.f32 %v1291, 0.3275911
        %v1324 = vmul.f32 %v1292, 0.3275911
        %v1325 = vmul.f32 %v1293, 0.3275911
        %v1326 = vmul.f32 %v1294, 0.3275911
        %v1327 = vmul.f32 %v1295, 0.3275911
        %v1328 = vmul.f32 %v1296, 0.3275911
        %v1329 = vmul.f32 %v1297, 0.3275911
        %v1330 = vmul.f32 %v1298, 0.3275911
        %v1331 = vmul.f32 %v1299, 0.3275911
        %v1332 = vmul.f32 %v1300, 0.3275911
        %v1333 = vmul.f32 %v1301, 0.3275911
        %v1334 = vmul.f32 %v1302, 0.3275911
        %v1335 = vmul.f32 %v1303, 0.3275911
        %v1336 = vmul.f32 %v1304, 0.3275911
        %v1337 = vmul.f32 %v1305, 0.3275911
        %v1338 = vmul.f32 %v1306, 0.3275911
        %v1339 = vmul.f32 %v1307, 0.3275911
        %v1340 = vmul.f32 %v1308, 0.3275911
        %v1341 = vmul.f32 %v1309, 0.3275911
        %v1342 = vmul.f32 %v1310, 0.3275911
        %v1343 = vmul.f32 %v1311, 0.3275911
        %v1344 = vmul.f32 %v1312, 0.3275911
        %v1345 = vmul.f32 %v1313, 0.3275911
        %v1346 = vmul.f32 %v1314, 0.3275911
        %v1347 = vmul.f32 %v1315, 0.3275911
        %v1348 = vmul.f32 %v1316, 0.3275911
        %v1349 = vmul.f32 %v1317, 0.3275911
        %v1350 = vmul.f32 %v1318, 0.3275911
        %v1351 = vmul.f32 %v1319, 0.3275911
        %v1352 = vadd.f32 %v1320, 1.0
        %v1353 = vadd.f32 %v1321, 1.0
        %v1354 = vadd.f32 %v1322, 1.0
        %v1355 = vadd.f32 %v1323, 1.0
        %v1356 = vadd.f32 %v1324, 1.0
        %v1357 = vadd.f32 %v1325, 1.0
        %v1358 = vadd.f32 %v1326, 1.0
        %v1359 = vadd.f32 %v1327, 1.0
        %v1360 = vadd.f32 %v1328, 1.0
        %v1361 = vadd.f32 %v1329, 1.0
        %v1362 = vadd.f32 %v1330, 1.0
        %v1363 = vadd.f32 %v1331, 1.0
        %v1364 = vadd.f32 %v1332, 1.0
        %v1365 = vadd.f32 %v1333, 1.0
        %v1366 = vadd.f32 %v1334, 1.0
        %v1367 = vadd.f32 %v1335, 1.0
        %v1368 = vadd.f32 %v1336, 1.0
        %v1369 = vadd.f32 %v1337, 1.0
        %v1370 = vadd.f32 %v1338, 1.0
        %v1371 = vadd.f32 %v1339, 1.0
        %v1372 = vadd.f32 %v1340, 1.0
        %v1373 = vadd.f32 %v1341, 1.0
        %v1374 = vadd.f32 %v1342, 1.0
        %v1375 = vadd.f32 %v1343, 1.0
        %v1376 = vadd.f32 %v1344, 1.0
        %v1377 = vadd.f32 %v1345, 1.0
        %v1378 = vadd.f32 %v1346, 1.0
        %v1379 = vadd.f32 %v1347, 1.0
        %v1380 = vadd.f32 %v1348, 1.0
        %v1381 = vadd.f32 %v1349, 1.0
        %v1382 = vadd.f32 %v1350, 1.0
        %v1383 = vadd.f32 %v1351, 1.0
        %v1384 = vrcp.pop %v1352
        %v1385 = vmul.f32 1.0, %v1384
        %v1386 = vrcp.pop %v1353
        %v1387 = vmul.f32 1.0, %v1386
        %v1388 = vrcp.pop %v1354
        %v1389 = vmul.f32 1.0, %v1388
        %v1390 = vrcp.pop %v1355
        %v1391 = vmul.f32 1.0, %v1390
        %v1392 = vrcp.pop %v1356
        %v1393 = vmul.f32 1.0, %v1392
        %v1394 = vrcp.pop %v1357
        %v1395 = vmul.f32 1.0, %v1394
        %v1396 = vrcp.pop %v1358
        %v1397 = vmul.f32 1.0, %v1396
        %v1398 = vrcp.pop %v1359
        %v1399 = vmul.f32 1.0, %v1398
        %v1400 = vrcp.pop %v1360
        %v1401 = vmul.f32 1.0, %v1400
        %v1402 = vrcp.pop %v1361
        %v1403 = vmul.f32 1.0, %v1402
        %v1404 = vrcp.pop %v1362
        %v1405 = vmul.f32 1.0, %v1404
        %v1406 = vrcp.pop %v1363
        %v1407 = vmul.f32 1.0, %v1406
        %v1408 = vrcp.pop %v1364
        %v1409 = vmul.f32 1.0, %v1408
        %v1410 = vrcp.pop %v1365
        %v1411 = vmul.f32 1.0, %v1410
        %v1412 = vrcp.pop %v1366
        %v1413 = vmul.f32 1.0, %v1412
        %v1414 = vrcp.pop %v1367
        %v1415 = vmul.f32 1.0, %v1414
        %v1416 = vrcp.pop %v1368
        %v1417 = vmul.f32 1.0, %v1416
        %v1418 = vrcp.pop %v1369
        %v1419 = vmul.f32 1.0, %v1418
        %v1420 = vrcp.pop %v1370
        %v1421 = vmul.f32 1.0, %v1420
        %v1422 = vrcp.pop %v1371
        %v1423 = vmul.f32 1.0, %v1422
        %v1424 = vrcp.pop %v1372
        %v1425 = vmul.f32 1.0, %v1424
        %v1426 = vrcp.pop %v1373
        %v1427 = vmul.f32 1.0, %v1426
        %v1428 = vrcp.pop %v1374
        %v1429 = vmul.f32 1.0, %v1428
        %v1430 = vrcp.pop %v1375
        %v1431 = vmul.f32 1.0, %v1430
        %v1432 = vrcp.pop %v1376
        %v1433 = vmul.f32 1.0, %v1432
        %v1434 = vrcp.pop %v1377
        %v1435 = vmul.f32 1.0, %v1434
        %v1436 = vrcp.pop %v1378
        %v1437 = vmul.f32 1.0, %v1436
        %v1438 = vrcp.pop %v1379
        %v1439 = vmul.f32 1.0, %v1438
        %v1440 = vrcp.pop %v1380
        %v1441 = vmul.f32 1.0, %v1440
        %v1442 = vrcp.pop %v1381
        %v1443 = vmul.f32 1.0, %v1442
        %v1444 = vrcp.pop %v1382
        %v1445 = vmul.f32 1.0, %v1444
        %v1446 = vrcp.pop %v1383
        %v1447 = vmul.f32 1.0, %v1446
        %v1448 = vmul.f32 %v1385, 1.0614054
        %v1449 = vmul.f32 %v1387, 1.0614054
        %v1450 = vmul.f32 %v1389, 1.0614054
        %v1451 = vmul.f32 %v1391, 1.0614054
        %v1452 = vmul.f32 %v1393, 1.0614054
        %v1453 = vmul.f32 %v1395, 1.0614054
        %v1454 = vmul.f32 %v1397, 1.0614054
        %v1455 = vmul.f32 %v1399, 1.0614054
        %v1456 = vmul.f32 %v1401, 1.0614054
        %v1457 = vmul.f32 %v1403, 1.0614054
        %v1458 = vmul.f32 %v1405, 1.0614054
        %v1459 = vmul.f32 %v1407, 1.0614054
        %v1460 = vmul.f32 %v1409, 1.0614054
        %v1461 = vmul.f32 %v1411, 1.0614054
        %v1462 = vmul.f32 %v1413, 1.0614054
        %v1463 = vmul.f32 %v1415, 1.0614054
        %v1464 = vmul.f32 %v1417, 1.0614054
        %v1465 = vmul.f32 %v1419, 1.0614054
        %v1466 = vmul.f32 %v1421, 1.0614054
        %v1467 = vmul.f32 %v1423, 1.0614054
        %v1468 = vmul.f32 %v1425, 1.0614054
        %v1469 = vmul.f32 %v1427, 1.0614054
        %v1470 = vmul.f32 %v1429, 1.0614054
        %v1471 = vmul.f32 %v1431, 1.0614054
        %v1472 = vmul.f32 %v1433, 1.0614054
        %v1473 = vmul.f32 %v1435, 1.0614054
        %v1474 = vmul.f32 %v1437, 1.0614054
        %v1475 = vmul.f32 %v1439, 1.0614054
        %v1476 = vmul.f32 %v1441, 1.0614054
        %v1477 = vmul.f32 %v1443, 1.0614054
        %v1478 = vmul.f32 %v1445, 1.0614054
        %v1479 = vmul.f32 %v1447, 1.0614054
        %v1480 = vadd.f32 %v1448, -1.4531521
        %v1481 = vadd.f32 %v1449, -1.4531521
        %v1482 = vadd.f32 %v1450, -1.4531521
        %v1483 = vadd.f32 %v1451, -1.4531521
        %v1484 = vadd.f32 %v1452, -1.4531521
        %v1485 = vadd.f32 %v1453, -1.4531521
        %v1486 = vadd.f32 %v1454, -1.4531521
        %v1487 = vadd.f32 %v1455, -1.4531521
        %v1488 = vadd.f32 %v1456, -1.4531521
        %v1489 = vadd.f32 %v1457, -1.4531521
        %v1490 = vadd.f32 %v1458, -1.4531521
        %v1491 = vadd.f32 %v1459, -1.4531521
        %v1492 = vadd.f32 %v1460, -1.4531521
        %v1493 = vadd.f32 %v1461, -1.4531521
        %v1494 = vadd.f32 %v1462, -1.4531521
        %v1495 = vadd.f32 %v1463, -1.4531521
        %v1496 = vadd.f32 %v1464, -1.4531521
        %v1497 = vadd.f32 %v1465, -1.4531521
        %v1498 = vadd.f32 %v1466, -1.4531521
        %v1499 = vadd.f32 %v1467, -1.4531521
        %v1500 = vadd.f32 %v1468, -1.4531521
        %v1501 = vadd.f32 %v1469, -1.4531521
        %v1502 = vadd.f32 %v1470, -1.4531521
        %v1503 = vadd.f32 %v1471, -1.4531521
        %v1504 = vadd.f32 %v1472, -1.4531521
        %v1505 = vadd.f32 %v1473, -1.4531521
        %v1506 = vadd.f32 %v1474, -1.4531521
        %v1507 = vadd.f32 %v1475, -1.4531521
        %v1508 = vadd.f32 %v1476, -1.4531521
        %v1509 = vadd.f32 %v1477, -1.4531521
        %v1510 = vadd.f32 %v1478, -1.4531521
        %v1511 = vadd.f32 %v1479, -1.4531521
        %v1512 = vmul.f32 %v1480, %v1385
        %v1513 = vmul.f32 %v1481, %v1387
        %v1514 = vmul.f32 %v1482, %v1389
        %v1515 = vmul.f32 %v1483, %v1391
        %v1516 = vmul.f32 %v1484, %v1393
        %v1517 = vmul.f32 %v1485, %v1395
        %v1518 = vmul.f32 %v1486, %v1397
        %v1519 = vmul.f32 %v1487, %v1399
        %v1520 = vmul.f32 %v1488, %v1401
        %v1521 = vmul.f32 %v1489, %v1403
        %v1522 = vmul.f32 %v1490, %v1405
        %v1523 = vmul.f32 %v1491, %v1407
        %v1524 = vmul.f32 %v1492, %v1409
        %v1525 = vmul.f32 %v1493, %v1411
        %v1526 = vmul.f32 %v1494, %v1413
        %v1527 = vmul.f32 %v1495, %v1415
        %v1528 = vmul.f32 %v1496, %v1417
        %v1529 = vmul.f32 %v1497, %v1419
        %v1530 = vmul.f32 %v1498, %v1421
        %v1531 = vmul.f32 %v1499, %v1423
        %v1532 = vmul.f32 %v1500, %v1425
        %v1533 = vmul.f32 %v1501, %v1427
        %v1534 = vmul.f32 %v1502, %v1429
        %v1535 = vmul.f32 %v1503, %v1431
        %v1536 = vmul.f32 %v1504, %v1433
        %v1537 = vmul.f32 %v1505, %v1435
        %v1538 = vmul.f32 %v1506, %v1437
        %v1539 = vmul.f32 %v1507, %v1439
        %v1540 = vmul.f32 %v1508, %v1441
        %v1541 = vmul.f32 %v1509, %v1443
        %v1542 = vmul.f32 %v1510, %v1445
        %v1543 = vmul.f32 %v1511, %v1447
        %v1544 = vadd.f32 %v1512, 1.4214138
        %v1545 = vadd.f32 %v1513, 1.4214138
        %v1546 = vadd.f32 %v1514, 1.4214138
        %v1547 = vadd.f32 %v1515, 1.4214138
        %v1548 = vadd.f32 %v1516, 1.4214138
        %v1549 = vadd.f32 %v1517, 1.4214138
        %v1550 = vadd.f32 %v1518, 1.4214138
        %v1551 = vadd.f32 %v1519, 1.4214138
        %v1552 = vadd.f32 %v1520, 1.4214138
        %v1553 = vadd.f32 %v1521, 1.4214138
        %v1554 = vadd.f32 %v1522, 1.4214138
        %v1555 = vadd.f32 %v1523, 1.4214138
        %v1556 = vadd.f32 %v1524, 1.4214138
        %v1557 = vadd.f32 %v1525, 1.4214138
        %v1558 = vadd.f32 %v1526, 1.4214138
        %v1559 = vadd.f32 %v1527, 1.4214138
        %v1560 = vadd.f32 %v1528, 1.4214138
        %v1561 = vadd.f32 %v1529, 1.4214138
        %v1562 = vadd.f32 %v1530, 1.4214138
        %v1563 = vadd.f32 %v1531, 1.4214138
        %v1564 = vadd.f32 %v1532, 1.4214138
        %v1565 = vadd.f32 %v1533, 1.4214138
        %v1566 = vadd.f32 %v1534, 1.4214138
        %v1567 = vadd.f32 %v1535, 1.4214138
        %v1568 = vadd.f32 %v1536, 1.4214138
        %v1569 = vadd.f32 %v1537, 1.4214138
        %v1570 = vadd.f32 %v1538, 1.4214138
        %v1571 = vadd.f32 %v1539, 1.4214138
        %v1572 = vadd.f32 %v1540, 1.4214138
        %v1573 = vadd.f32 %v1541, 1.4214138
        %v1574 = vadd.f32 %v1542, 1.4214138
        %v1575 = vadd.f32 %v1543, 1.4214138
        %v1576 = vmul.f32 %v1544, %v1385
        %v1577 = vmul.f32 %v1545, %v1387
        %v1578 = vmul.f32 %v1546, %v1389
        %v1579 = vmul.f32 %v1547, %v1391
        %v1580 = vmul.f32 %v1548, %v1393
        %v1581 = vmul.f32 %v1549, %v1395
        %v1582 = vmul.f32 %v1550, %v1397
        %v1583 = vmul.f32 %v1551, %v1399
        %v1584 = vmul.f32 %v1552, %v1401
        %v1585 = vmul.f32 %v1553, %v1403
        %v1586 = vmul.f32 %v1554, %v1405
        %v1587 = vmul.f32 %v1555, %v1407
        %v1588 = vmul.f32 %v1556, %v1409
        %v1589 = vmul.f32 %v1557, %v1411
        %v1590 = vmul.f32 %v1558, %v1413
        %v1591 = vmul.f32 %v1559, %v1415
        %v1592 = vmul.f32 %v1560, %v1417
        %v1593 = vmul.f32 %v1561, %v1419
        %v1594 = vmul.f32 %v1562, %v1421
        %v1595 = vmul.f32 %v1563, %v1423
        %v1596 = vmul.f32 %v1564, %v1425
        %v1597 = vmul.f32 %v1565, %v1427
        %v1598 = vmul.f32 %v1566, %v1429
        %v1599 = vmul.f32 %v1567, %v1431
        %v1600 = vmul.f32 %v1568, %v1433
        %v1601 = vmul.f32 %v1569, %v1435
        %v1602 = vmul.f32 %v1570, %v1437
        %v1603 = vmul.f32 %v1571, %v1439
        %v1604 = vmul.f32 %v1572, %v1441
        %v1605 = vmul.f32 %v1573, %v1443
        %v1606 = vmul.f32 %v1574, %v1445
        %v1607 = vmul.f32 %v1575, %v1447
        %v1608 = vadd.f32 %v1576, -0.28449672
        %v1609 = vadd.f32 %v1577, -0.28449672
        %v1610 = vadd.f32 %v1578, -0.28449672
        %v1611 = vadd.f32 %v1579, -0.28449672
        %v1612 = vadd.f32 %v1580, -0.28449672
        %v1613 = vadd.f32 %v1581, -0.28449672
        %v1614 = vadd.f32 %v1582, -0.28449672
        %v1615 = vadd.f32 %v1583, -0.28449672
        %v1616 = vadd.f32 %v1584, -0.28449672
        %v1617 = vadd.f32 %v1585, -0.28449672
        %v1618 = vadd.f32 %v1586, -0.28449672
        %v1619 = vadd.f32 %v1587, -0.28449672
        %v1620 = vadd.f32 %v1588, -0.28449672
        %v1621 = vadd.f32 %v1589, -0.28449672
        %v1622 = vadd.f32 %v1590, -0.28449672
        %v1623 = vadd.f32 %v1591, -0.28449672
        %v1624 = vadd.f32 %v1592, -0.28449672
        %v1625 = vadd.f32 %v1593, -0.28449672
        %v1626 = vadd.f32 %v1594, -0.28449672
        %v1627 = vadd.f32 %v1595, -0.28449672
        %v1628 = vadd.f32 %v1596, -0.28449672
        %v1629 = vadd.f32 %v1597, -0.28449672
        %v1630 = vadd.f32 %v1598, -0.28449672
        %v1631 = vadd.f32 %v1599, -0.28449672
        %v1632 = vadd.f32 %v1600, -0.28449672
        %v1633 = vadd.f32 %v1601, -0.28449672
        %v1634 = vadd.f32 %v1602, -0.28449672
        %v1635 = vadd.f32 %v1603, -0.28449672
        %v1636 = vadd.f32 %v1604, -0.28449672
        %v1637 = vadd.f32 %v1605, -0.28449672
        %v1638 = vadd.f32 %v1606, -0.28449672
        %v1639 = vadd.f32 %v1607, -0.28449672
        %v1640 = vmul.f32 %v1608, %v1385
        %v1641 = vmul.f32 %v1609, %v1387
        %v1642 = vmul.f32 %v1610, %v1389
        %v1643 = vmul.f32 %v1611, %v1391
        %v1644 = vmul.f32 %v1612, %v1393
        %v1645 = vmul.f32 %v1613, %v1395
        %v1646 = vmul.f32 %v1614, %v1397
        %v1647 = vmul.f32 %v1615, %v1399
        %v1648 = vmul.f32 %v1616, %v1401
        %v1649 = vmul.f32 %v1617, %v1403
        %v1650 = vmul.f32 %v1618, %v1405
        %v1651 = vmul.f32 %v1619, %v1407
        %v1652 = vmul.f32 %v1620, %v1409
        %v1653 = vmul.f32 %v1621, %v1411
        %v1654 = vmul.f32 %v1622, %v1413
        %v1655 = vmul.f32 %v1623, %v1415
        %v1656 = vmul.f32 %v1624, %v1417
        %v1657 = vmul.f32 %v1625, %v1419
        %v1658 = vmul.f32 %v1626, %v1421
        %v1659 = vmul.f32 %v1627, %v1423
        %v1660 = vmul.f32 %v1628, %v1425
        %v1661 = vmul.f32 %v1629, %v1427
        %v1662 = vmul.f32 %v1630, %v1429
        %v1663 = vmul.f32 %v1631, %v1431
        %v1664 = vmul.f32 %v1632, %v1433
        %v1665 = vmul.f32 %v1633, %v1435
        %v1666 = vmul.f32 %v1634, %v1437
        %v1667 = vmul.f32 %v1635, %v1439
        %v1668 = vmul.f32 %v1636, %v1441
        %v1669 = vmul.f32 %v1637, %v1443
        %v1670 = vmul.f32 %v1638, %v1445
        %v1671 = vmul.f32 %v1639, %v1447
        %v1672 = vadd.f32 %v1640, 0.2548296
        %v1673 = vadd.f32 %v1641, 0.2548296
        %v1674 = vadd.f32 %v1642, 0.2548296
        %v1675 = vadd.f32 %v1643, 0.2548296
        %v1676 = vadd.f32 %v1644, 0.2548296
        %v1677 = vadd.f32 %v1645, 0.2548296
        %v1678 = vadd.f32 %v1646, 0.2548296
        %v1679 = vadd.f32 %v1647, 0.2548296
        %v1680 = vadd.f32 %v1648, 0.2548296
        %v1681 = vadd.f32 %v1649, 0.2548296
        %v1682 = vadd.f32 %v1650, 0.2548296
        %v1683 = vadd.f32 %v1651, 0.2548296
        %v1684 = vadd.f32 %v1652, 0.2548296
        %v1685 = vadd.f32 %v1653, 0.2548296
        %v1686 = vadd.f32 %v1654, 0.2548296
        %v1687 = vadd.f32 %v1655, 0.2548296
        %v1688 = vadd.f32 %v1656, 0.2548296
        %v1689 = vadd.f32 %v1657, 0.2548296
        %v1690 = vadd.f32 %v1658, 0.2548296
        %v1691 = vadd.f32 %v1659, 0.2548296
        %v1692 = vadd.f32 %v1660, 0.2548296
        %v1693 = vadd.f32 %v1661, 0.2548296
        %v1694 = vadd.f32 %v1662, 0.2548296
        %v1695 = vadd.f32 %v1663, 0.2548296
        %v1696 = vadd.f32 %v1664, 0.2548296
        %v1697 = vadd.f32 %v1665, 0.2548296
        %v1698 = vadd.f32 %v1666, 0.2548296
        %v1699 = vadd.f32 %v1667, 0.2548296
        %v1700 = vadd.f32 %v1668, 0.2548296
        %v1701 = vadd.f32 %v1669, 0.2548296
        %v1702 = vadd.f32 %v1670, 0.2548296
        %v1703 = vadd.f32 %v1671, 0.2548296
        %v1704 = vmul.f32 %v1672, %v1385
        %v1705 = vmul.f32 %v1673, %v1387
        %v1706 = vmul.f32 %v1674, %v1389
        %v1707 = vmul.f32 %v1675, %v1391
        %v1708 = vmul.f32 %v1676, %v1393
        %v1709 = vmul.f32 %v1677, %v1395
        %v1710 = vmul.f32 %v1678, %v1397
        %v1711 = vmul.f32 %v1679, %v1399
        %v1712 = vmul.f32 %v1680, %v1401
        %v1713 = vmul.f32 %v1681, %v1403
        %v1714 = vmul.f32 %v1682, %v1405
        %v1715 = vmul.f32 %v1683, %v1407
        %v1716 = vmul.f32 %v1684, %v1409
        %v1717 = vmul.f32 %v1685, %v1411
        %v1718 = vmul.f32 %v1686, %v1413
        %v1719 = vmul.f32 %v1687, %v1415
        %v1720 = vmul.f32 %v1688, %v1417
        %v1721 = vmul.f32 %v1689, %v1419
        %v1722 = vmul.f32 %v1690, %v1421
        %v1723 = vmul.f32 %v1691, %v1423
        %v1724 = vmul.f32 %v1692, %v1425
        %v1725 = vmul.f32 %v1693, %v1427
        %v1726 = vmul.f32 %v1694, %v1429
        %v1727 = vmul.f32 %v1695, %v1431
        %v1728 = vmul.f32 %v1696, %v1433
        %v1729 = vmul.f32 %v1697, %v1435
        %v1730 = vmul.f32 %v1698, %v1437
        %v1731 = vmul.f32 %v1699, %v1439
        %v1732 = vmul.f32 %v1700, %v1441
        %v1733 = vmul.f32 %v1701, %v1443
        %v1734 = vmul.f32 %v1702, %v1445
        %v1735 = vmul.f32 %v1703, %v1447
        %v1736 = vsub.f32 0.0, %v1288
        %v1737 = vsub.f32 0.0, %v1289
        %v1738 = vsub.f32 0.0, %v1290
        %v1739 = vsub.f32 0.0, %v1291
        %v1740 = vsub.f32 0.0, %v1292
        %v1741 = vsub.f32 0.0, %v1293
        %v1742 = vsub.f32 0.0, %v1294
        %v1743 = vsub.f32 0.0, %v1295
        %v1744 = vsub.f32 0.0, %v1296
        %v1745 = vsub.f32 0.0, %v1297
        %v1746 = vsub.f32 0.0, %v1298
        %v1747 = vsub.f32 0.0, %v1299
        %v1748 = vsub.f32 0.0, %v1300
        %v1749 = vsub.f32 0.0, %v1301
        %v1750 = vsub.f32 0.0, %v1302
        %v1751 = vsub.f32 0.0, %v1303
        %v1752 = vsub.f32 0.0, %v1304
        %v1753 = vsub.f32 0.0, %v1305
        %v1754 = vsub.f32 0.0, %v1306
        %v1755 = vsub.f32 0.0, %v1307
        %v1756 = vsub.f32 0.0, %v1308
        %v1757 = vsub.f32 0.0, %v1309
        %v1758 = vsub.f32 0.0, %v1310
        %v1759 = vsub.f32 0.0, %v1311
        %v1760 = vsub.f32 0.0, %v1312
        %v1761 = vsub.f32 0.0, %v1313
        %v1762 = vsub.f32 0.0, %v1314
        %v1763 = vsub.f32 0.0, %v1315
        %v1764 = vsub.f32 0.0, %v1316
        %v1765 = vsub.f32 0.0, %v1317
        %v1766 = vsub.f32 0.0, %v1318
        %v1767 = vsub.f32 0.0, %v1319
        %v1768 = vmul.f32 %v1736, %v1288
        %v1769 = vmul.f32 %v1737, %v1289
        %v1770 = vmul.f32 %v1738, %v1290
        %v1771 = vmul.f32 %v1739, %v1291
        %v1772 = vmul.f32 %v1740, %v1292
        %v1773 = vmul.f32 %v1741, %v1293
        %v1774 = vmul.f32 %v1742, %v1294
        %v1775 = vmul.f32 %v1743, %v1295
        %v1776 = vmul.f32 %v1744, %v1296
        %v1777 = vmul.f32 %v1745, %v1297
        %v1778 = vmul.f32 %v1746, %v1298
        %v1779 = vmul.f32 %v1747, %v1299
        %v1780 = vmul.f32 %v1748, %v1300
        %v1781 = vmul.f32 %v1749, %v1301
        %v1782 = vmul.f32 %v1750, %v1302
        %v1783 = vmul.f32 %v1751, %v1303
        %v1784 = vmul.f32 %v1752, %v1304
        %v1785 = vmul.f32 %v1753, %v1305
        %v1786 = vmul.f32 %v1754, %v1306
        %v1787 = vmul.f32 %v1755, %v1307
        %v1788 = vmul.f32 %v1756, %v1308
        %v1789 = vmul.f32 %v1757, %v1309
        %v1790 = vmul.f32 %v1758, %v1310
        %v1791 = vmul.f32 %v1759, %v1311
        %v1792 = vmul.f32 %v1760, %v1312
        %v1793 = vmul.f32 %v1761, %v1313
        %v1794 = vmul.f32 %v1762, %v1314
        %v1795 = vmul.f32 %v1763, %v1315
        %v1796 = vmul.f32 %v1764, %v1316
        %v1797 = vmul.f32 %v1765, %v1317
        %v1798 = vmul.f32 %v1766, %v1318
        %v1799 = vmul.f32 %v1767, %v1319
        %v1800 = vmul.f32 %v1768, 1.442695
        %v1801 = vpow.pop %v1800
        %v1802 = vmul.f32 %v1769, 1.442695
        %v1803 = vpow.pop %v1802
        %v1804 = vmul.f32 %v1770, 1.442695
        %v1805 = vpow.pop %v1804
        %v1806 = vmul.f32 %v1771, 1.442695
        %v1807 = vpow.pop %v1806
        %v1808 = vmul.f32 %v1772, 1.442695
        %v1809 = vpow.pop %v1808
        %v1810 = vmul.f32 %v1773, 1.442695
        %v1811 = vpow.pop %v1810
        %v1812 = vmul.f32 %v1774, 1.442695
        %v1813 = vpow.pop %v1812
        %v1814 = vmul.f32 %v1775, 1.442695
        %v1815 = vpow.pop %v1814
        %v1816 = vmul.f32 %v1776, 1.442695
        %v1817 = vpow.pop %v1816
        %v1818 = vmul.f32 %v1777, 1.442695
        %v1819 = vpow.pop %v1818
        %v1820 = vmul.f32 %v1778, 1.442695
        %v1821 = vpow.pop %v1820
        %v1822 = vmul.f32 %v1779, 1.442695
        %v1823 = vpow.pop %v1822
        %v1824 = vmul.f32 %v1780, 1.442695
        %v1825 = vpow.pop %v1824
        %v1826 = vmul.f32 %v1781, 1.442695
        %v1827 = vpow.pop %v1826
        %v1828 = vmul.f32 %v1782, 1.442695
        %v1829 = vpow.pop %v1828
        %v1830 = vmul.f32 %v1783, 1.442695
        %v1831 = vpow.pop %v1830
        %v1832 = vmul.f32 %v1784, 1.442695
        %v1833 = vpow.pop %v1832
        %v1834 = vmul.f32 %v1785, 1.442695
        %v1835 = vpow.pop %v1834
        %v1836 = vmul.f32 %v1786, 1.442695
        %v1837 = vpow.pop %v1836
        %v1838 = vmul.f32 %v1787, 1.442695
        %v1839 = vpow.pop %v1838
        %v1840 = vmul.f32 %v1788, 1.442695
        %v1841 = vpow.pop %v1840
        %v1842 = vmul.f32 %v1789, 1.442695
        %v1843 = vpow.pop %v1842
        %v1844 = vmul.f32 %v1790, 1.442695
        %v1845 = vpow.pop %v1844
        %v1846 = vmul.f32 %v1791, 1.442695
        %v1847 = vpow.pop %v1846
        %v1848 = vmul.f32 %v1792, 1.442695
        %v1849 = vpow.pop %v1848
        %v1850 = vmul.f32 %v1793, 1.442695
        %v1851 = vpow.pop %v1850
        %v1852 = vmul.f32 %v1794, 1.442695
        %v1853 = vpow.pop %v1852
        %v1854 = vmul.f32 %v1795, 1.442695
        %v1855 = vpow.pop %v1854
        %v1856 = vmul.f32 %v1796, 1.442695
        %v1857 = vpow.pop %v1856
        %v1858 = vmul.f32 %v1797, 1.442695
        %v1859 = vpow.pop %v1858
        %v1860 = vmul.f32 %v1798, 1.442695
        %v1861 = vpow.pop %v1860
        %v1862 = vmul.f32 %v1799, 1.442695
        %v1863 = vpow.pop %v1862
        %v1864 = vmul.f32 %v1704, %v1801
        %v1865 = vmul.f32 %v1705, %v1803
        %v1866 = vmul.f32 %v1706, %v1805
        %v1867 = vmul.f32 %v1707, %v1807
        %v1868 = vmul.f32 %v1708, %v1809
        %v1869 = vmul.f32 %v1709, %v1811
        %v1870 = vmul.f32 %v1710, %v1813
        %v1871 = vmul.f32 %v1711, %v1815
        %v1872 = vmul.f32 %v1712, %v1817
        %v1873 = vmul.f32 %v1713, %v1819
        %v1874 = vmul.f32 %v1714, %v1821
        %v1875 = vmul.f32 %v1715, %v1823
        %v1876 = vmul.f32 %v1716, %v1825
        %v1877 = vmul.f32 %v1717, %v1827
        %v1878 = vmul.f32 %v1718, %v1829
        %v1879 = vmul.f32 %v1719, %v1831
        %v1880 = vmul.f32 %v1720, %v1833
        %v1881 = vmul.f32 %v1721, %v1835
        %v1882 = vmul.f32 %v1722, %v1837
        %v1883 = vmul.f32 %v1723, %v1839
        %v1884 = vmul.f32 %v1724, %v1841
        %v1885 = vmul.f32 %v1725, %v1843
        %v1886 = vmul.f32 %v1726, %v1845
        %v1887 = vmul.f32 %v1727, %v1847
        %v1888 = vmul.f32 %v1728, %v1849
        %v1889 = vmul.f32 %v1729, %v1851
        %v1890 = vmul.f32 %v1730, %v1853
        %v1891 = vmul.f32 %v1731, %v1855
        %v1892 = vmul.f32 %v1732, %v1857
        %v1893 = vmul.f32 %v1733, %v1859
        %v1894 = vmul.f32 %v1734, %v1861
        %v1895 = vmul.f32 %v1735, %v1863
        %v1896 = vsub.f32 1.0, %v1864
        %v1897 = vsub.f32 1.0, %v1865
        %v1898 = vsub.f32 1.0, %v1866
        %v1899 = vsub.f32 1.0, %v1867
        %v1900 = vsub.f32 1.0, %v1868
        %v1901 = vsub.f32 1.0, %v1869
        %v1902 = vsub.f32 1.0, %v1870
        %v1903 = vsub.f32 1.0, %v1871
        %v1904 = vsub.f32 1.0, %v1872
        %v1905 = vsub.f32 1.0, %v1873
        %v1906 = vsub.f32 1.0, %v1874
        %v1907 = vsub.f32 1.0, %v1875
        %v1908 = vsub.f32 1.0, %v1876
        %v1909 = vsub.f32 1.0, %v1877
        %v1910 = vsub.f32 1.0, %v1878
        %v1911 = vsub.f32 1.0, %v1879
        %v1912 = vsub.f32 1.0, %v1880
        %v1913 = vsub.f32 1.0, %v1881
        %v1914 = vsub.f32 1.0, %v1882
        %v1915 = vsub.f32 1.0, %v1883
        %v1916 = vsub.f32 1.0, %v1884
        %v1917 = vsub.f32 1.0, %v1885
        %v1918 = vsub.f32 1.0, %v1886
        %v1919 = vsub.f32 1.0, %v1887
        %v1920 = vsub.f32 1.0, %v1888
        %v1921 = vsub.f32 1.0, %v1889
        %v1922 = vsub.f32 1.0, %v1890
        %v1923 = vsub.f32 1.0, %v1891
        %v1924 = vsub.f32 1.0, %v1892
        %v1925 = vsub.f32 1.0, %v1893
        %v1926 = vsub.f32 1.0, %v1894
        %v1927 = vsub.f32 1.0, %v1895
        %vm1928 = vcmp.ge.f32.partialorder %v1256, 0.0
        %vm1929 = vcmp.ge.f32.partialorder %v1257, 0.0
        %vm1930 = vcmp.ge.f32.partialorder %v1258, 0.0
        %vm1931 = vcmp.ge.f32.partialorder %v1259, 0.0
        %vm1932 = vcmp.ge.f32.partialorder %v1260, 0.0
        %vm1933 = vcmp.ge.f32.partialorder %v1261, 0.0
        %vm1934 = vcmp.ge.f32.partialorder %v1262, 0.0
        %vm1935 = vcmp.ge.f32.partialorder %v1263, 0.0
        %vm1936 = vcmp.ge.f32.partialorder %v1264, 0.0
        %vm1937 = vcmp.ge.f32.partialorder %v1265, 0.0
        %vm1938 = vcmp.ge.f32.partialorder %v1266, 0.0
        %vm1939 = vcmp.ge.f32.partialorder %v1267, 0.0
        %vm1940 = vcmp.ge.f32.partialorder %v1268, 0.0
        %vm1941 = vcmp.ge.f32.partialorder %v1269, 0.0
        %vm1942 = vcmp.ge.f32.partialorder %v1270, 0.0
        %vm1943 = vcmp.ge.f32.partialorder %v1271, 0.0
        %vm1944 = vcmp.ge.f32.partialorder %v1272, 0.0
        %vm1945 = vcmp.ge.f32.partialorder %v1273, 0.0
        %vm1946 = vcmp.ge.f32.partialorder %v1274, 0.0
        %vm1947 = vcmp.ge.f32.partialorder %v1275, 0.0
        %vm1948 = vcmp.ge.f32.partialorder %v1276, 0.0
        %vm1949 = vcmp.ge.f32.partialorder %v1277, 0.0
        %vm1950 = vcmp.ge.f32.partialorder %v1278, 0.0
        %vm1951 = vcmp.ge.f32.partialorder %v1279, 0.0
        %vm1952 = vcmp.ge.f32.partialorder %v1280, 0.0
        %vm1953 = vcmp.ge.f32.partialorder %v1281, 0.0
        %vm1954 = vcmp.ge.f32.partialorder %v1282, 0.0
        %vm1955 = vcmp.ge.f32.partialorder %v1283, 0.0
        %vm1956 = vcmp.ge.f32.partialorder %v1284, 0.0
        %vm1957 = vcmp.ge.f32.partialorder %v1285, 0.0
        %vm1958 = vcmp.ge.f32.partialorder %v1286, 0.0
        %vm1959 = vcmp.ge.f32.partialorder %v1287, 0.0
        %v1960 = vsub.f32 0.0, %v1896
        %v1961 = vsub.f32 0.0, %v1897
        %v1962 = vsub.f32 0.0, %v1898
        %v1963 = vsub.f32 0.0, %v1899
        %v1964 = vsub.f32 0.0, %v1900
        %v1965 = vsub.f32 0.0, %v1901
        %v1966 = vsub.f32 0.0, %v1902
        %v1967 = vsub.f32 0.0, %v1903
        %v1968 = vsub.f32 0.0, %v1904
        %v1969 = vsub.f32 0.0, %v1905
        %v1970 = vsub.f32 0.0, %v1906
        %v1971 = vsub.f32 0.0, %v1907
        %v1972 = vsub.f32 0.0, %v1908
        %v1973 = vsub.f32 0.0, %v1909
        %v1974 = vsub.f32 0.0, %v1910
        %v1975 = vsub.f32 0.0, %v1911
        %v1976 = vsub.f32 0.0, %v1912
        %v1977 = vsub.f32 0.0, %v1913
        %v1978 = vsub.f32 0.0, %v1914
        %v1979 = vsub.f32 0.0, %v1915
        %v1980 = vsub.f32 0.0, %v1916
        %v1981 = vsub.f32 0.0, %v1917
        %v1982 = vsub.f32 0.0, %v1918
        %v1983 = vsub.f32 0.0, %v1919
        %v1984 = vsub.f32 0.0, %v1920
        %v1985 = vsub.f32 0.0, %v1921
        %v1986 = vsub.f32 0.0, %v1922
        %v1987 = vsub.f32 0.0, %v1923
        %v1988 = vsub.f32 0.0, %v1924
        %v1989 = vsub.f32 0.0, %v1925
        %v1990 = vsub.f32 0.0, %v1926
        %v1991 = vsub.f32 0.0, %v1927
        %v1992 = vsel %vm1928, %v1896, %v1960
        %v1993 = vsel %vm1929, %v1897, %v1961
        %v1994 = vsel %vm1930, %v1898, %v1962
        %v1995 = vsel %vm1931, %v1899, %v1963
        %v1996 = vsel %vm1932, %v1900, %v1964
        %v1997 = vsel %vm1933, %v1901, %v1965
        %v1998 = vsel %vm1934, %v1902, %v1966
        %v1999 = vsel %vm1935, %v1903, %v1967
        %v2000 = vsel %vm1936, %v1904, %v1968
        %v2001 = vsel %vm1937, %v1905, %v1969
        %v2002 = vsel %vm1938, %v1906, %v1970
        %v2003 = vsel %vm1939, %v1907, %v1971
        %v2004 = vsel %vm1940, %v1908, %v1972
        %v2005 = vsel %vm1941, %v1909, %v1973
        %v2006 = vsel %vm1942, %v1910, %v1974
        %v2007 = vsel %vm1943, %v1911, %v1975
        %v2008 = vsel %vm1944, %v1912, %v1976
        %v2009 = vsel %vm1945, %v1913, %v1977
        %v2010 = vsel %vm1946, %v1914, %v1978
        %v2011 = vsel %vm1947, %v1915, %v1979
        %v2012 = vsel %vm1948, %v1916, %v1980
        %v2013 = vsel %vm1949, %v1917, %v1981
        %v2014 = vsel %vm1950, %v1918, %v1982
        %v2015 = vsel %vm1951, %v1919, %v1983
        %v2016 = vsel %vm1952, %v1920, %v1984
        %v2017 = vsel %vm1953, %v1921, %v1985
        %v2018 = vsel %vm1954, %v1922, %v1986
        %v2019 = vsel %vm1955, %v1923, %v1987
        %v2020 = vsel %vm1956, %v1924, %v1988
        %v2021 = vsel %vm1957, %v1925, %v1989
        %v2022 = vsel %vm1958, %v1926, %v1990
        %v2023 = vsel %vm1959, %v1927, %v1991
        %v2024 = vadd.f32 %v1992, 1.0
        %v2025 = vadd.f32 %v1993, 1.0
        %v2026 = vadd.f32 %v1994, 1.0
        %v2027 = vadd.f32 %v1995, 1.0
        %v2028 = vadd.f32 %v1996, 1.0
        %v2029 = vadd.f32 %v1997, 1.0
        %v2030 = vadd.f32 %v1998, 1.0
        %v2031 = vadd.f32 %v1999, 1.0
        %v2032 = vadd.f32 %v2000, 1.0
        %v2033 = vadd.f32 %v2001, 1.0
        %v2034 = vadd.f32 %v2002, 1.0
        %v2035 = vadd.f32 %v2003, 1.0
        %v2036 = vadd.f32 %v2004, 1.0
        %v2037 = vadd.f32 %v2005, 1.0
        %v2038 = vadd.f32 %v2006, 1.0
        %v2039 = vadd.f32 %v2007, 1.0
        %v2040 = vadd.f32 %v2008, 1.0
        %v2041 = vadd.f32 %v2009, 1.0
        %v2042 = vadd.f32 %v2010, 1.0
        %v2043 = vadd.f32 %v2011, 1.0
        %v2044 = vadd.f32 %v2012, 1.0
        %v2045 = vadd.f32 %v2013, 1.0
        %v2046 = vadd.f32 %v2014, 1.0
        %v2047 = vadd.f32 %v2015, 1.0
        %v2048 = vadd.f32 %v2016, 1.0
        %v2049 = vadd.f32 %v2017, 1.0
        %v2050 = vadd.f32 %v2018, 1.0
        %v2051 = vadd.f32 %v2019, 1.0
        %v2052 = vadd.f32 %v2020, 1.0
        %v2053 = vadd.f32 %v2021, 1.0
        %v2054 = vadd.f32 %v2022, 1.0
        %v2055 = vadd.f32 %v2023, 1.0
        %v2056 = vmul.f32 %v1224, %v2024
        %v2057 = vmul.f32 %v1225, %v2025
        %v2058 = vmul.f32 %v1226, %v2026
        %v2059 = vmul.f32 %v1227, %v2027
        %v2060 = vmul.f32 %v1228, %v2028
        %v2061 = vmul.f32 %v1229, %v2029
        %v2062 = vmul.f32 %v1230, %v2030
        %v2063 = vmul.f32 %v1231, %v2031
        %v2064 = vmul.f32 %v1232, %v2032
        %v2065 = vmul.f32 %v1233, %v2033
        %v2066 = vmul.f32 %v1234, %v2034
        %v2067 = vmul.f32 %v1235, %v2035
        %v2068 = vmul.f32 %v1236, %v2036
        %v2069 = vmul.f32 %v1237, %v2037
        %v2070 = vmul.f32 %v1238, %v2038
        %v2071 = vmul.f32 %v1239, %v2039
        %v2072 = vmul.f32 %v1240, %v2040
        %v2073 = vmul.f32 %v1241, %v2041
        %v2074 = vmul.f32 %v1242, %v2042
        %v2075 = vmul.f32 %v1243, %v2043
        %v2076 = vmul.f32 %v1244, %v2044
        %v2077 = vmul.f32 %v1245, %v2045
        %v2078 = vmul.f32 %v1246, %v2046
        %v2079 = vmul.f32 %v1247, %v2047
        %v2080 = vmul.f32 %v1248, %v2048
        %v2081 = vmul.f32 %v1249, %v2049
        %v2082 = vmul.f32 %v1250, %v2050
        %v2083 = vmul.f32 %v1251, %v2051
        %v2084 = vmul.f32 %v1252, %v2052
        %v2085 = vmul.f32 %v1253, %v2053
        %v2086 = vmul.f32 %v1254, %v2054
        %v2087 = vmul.f32 %v1255, %v2055
        %vm2088 = vcmask 523264
        %2089 = vst.msk [vmem:[%s325] sm:$0xff] %vm2088, %v2056
        %2090 = vst.msk [vmem:[%s325 + $0x8] sm:$0xff] %vm2088, %v2057
        %2091 = vst.msk [vmem:[%s325 + $0x10] sm:$0xff] %vm2088, %v2058
        %2092 = vst.msk [vmem:[%s325 + $0x18] sm:$0xff] %vm2088, %v2059
        %2093 = vst.msk [vmem:[%s325 + $0x20] sm:$0xff] %vm2088, %v2060
        %2094 = vst.msk [vmem:[%s325 + $0x28] sm:$0xff] %vm2088, %v2061
        %2095 = vst.msk [vmem:[%s325 + $0x30] sm:$0xff] %vm2088, %v2062
        %2096 = vst.msk [vmem:[%s325 + $0x38] sm:$0xff] %vm2088, %v2063
        %2097 = vst.msk [vmem:[%s325 + $0x40] sm:$0xff] %vm2088, %v2064
        %2098 = vst.msk [vmem:[%s325 + $0x48] sm:$0xff] %vm2088, %v2065
        %2099 = vst.msk [vmem:[%s325 + $0x50] sm:$0xff] %vm2088, %v2066
        %2100 = vst.msk [vmem:[%s325 + $0x58] sm:$0xff] %vm2088, %v2067
        %2101 = vst.msk [vmem:[%s325 + $0x60] sm:$0xff] %vm2088, %v2068
        %2102 = vst.msk [vmem:[%s325 + $0x68] sm:$0xff] %vm2088, %v2069
        %2103 = vst.msk [vmem:[%s325 + $0x70] sm:$0xff] %vm2088, %v2070
        %2104 = vst.msk [vmem:[%s325 + $0x78] sm:$0xff] %vm2088, %v2071
        %2105 = vst.msk [vmem:[%s325 + $0x80] sm:$0xff] %vm2088, %v2072
        %2106 = vst.msk [vmem:[%s325 + $0x88] sm:$0xff] %vm2088, %v2073
        %2107 = vst.msk [vmem:[%s325 + $0x90] sm:$0xff] %vm2088, %v2074
        %2108 = vst.msk [vmem:[%s325 + $0x98] sm:$0xff] %vm2088, %v2075
        %2109 = vst.msk [vmem:[%s325 + $0xa0] sm:$0xff] %vm2088, %v2076
        %2110 = vst.msk [vmem:[%s325 + $0xa8] sm:$0xff] %vm2088, %v2077
        %2111 = vst.msk [vmem:[%s325 + $0xb0] sm:$0xff] %vm2088, %v2078
        %2112 = vst.msk [vmem:[%s325 + $0xb8] sm:$0xff] %vm2088, %v2079
        %2113 = vst.msk [vmem:[%s325 + $0xc0] sm:$0xff] %vm2088, %v2080
        %2114 = vst.msk [vmem:[%s325 + $0xc8] sm:$0xff] %vm2088, %v2081
        %2115 = vst.msk [vmem:[%s325 + $0xd0] sm:$0xff] %vm2088, %v2082
        %2116 = vst.msk [vmem:[%s325 + $0xd8] sm:$0xff] %vm2088, %v2083
        %2117 = vst.msk [vmem:[%s325 + $0xe0] sm:$0xff] %vm2088, %v2084
        %2118 = vst.msk [vmem:[%s325 + $0xe8] sm:$0xff] %vm2088, %v2085
        %2119 = vst.msk [vmem:[%s325 + $0xf0] sm:$0xff] %vm2088, %v2086
        %2120 = vst.msk [vmem:[%s325 + $0xf8] sm:$0xff] %vm2088, %v2087
        %s2121 = smul.u32 32, %s26
        %p2122 = scmp.lt.s32.totalorder %s25, 1
        %s2123 = scalar_select %p2122, %s25, 1
        %p2124 = scmp.lt.s32.totalorder %s2121, 63
        %s2125 = scalar_select %p2124, %s2121, 63
        %s2126 = smul.addr %s2123, 64
        %s2127 = sadd.s32 %s2125, %s2126
        %s2128 = smul.addr %s2127, 8
        %s2129 = scalar_lea.vmem %s7, %s2128
        // Predicated region
        $region53: #{tpu_custom_call.1} parent=47 // pred_check
          %p2130 = pneg %p207
        $region54: #{tpu_custom_call.1} parent=47 // pred_check_branch
          %2132 = sbr.rel (%p2130) target = $region56
        $region55: #{tpu_custom_call.1} parent=47 // pred_region
          %s2133 = smul.u32 32, %s26
        $region56: #{tpu_custom_call.1} parent=47 // pred_fallthru
          _
      $region48: #{tpu_custom_call.1} parent=5 // pred_fallthru
        _
      %p2134 = scmp.le.s32.totalorder 2, %s16
      // Predicated region
      $region57: #{tpu_custom_call.1} parent=5 // pred_check
        %p2135 = pneg %p2134
      $region58: #{tpu_custom_call.1} parent=5 // pred_check_branch
        %2137 = sbr.rel (%p2135) target = $region60
      $region59: #{tpu_custom_call.1} parent=5 // pred_region
        %s2138 = ssub.s32 %s16, 2
        // Predicated region
        $region61: #{tpu_custom_call.1} parent=59 // pred_check
          %p2139 = pneg %p213
        $region62: #{tpu_custom_call.1} parent=59 // pred_check_branch
          %2141 = sbr.rel (%p2139) target = $region64
        $region63: #{tpu_custom_call.1} parent=59 // pred_region
          %s2142 = smul.u32 32, %s28
          %p2143 = scmp.lt.s32.totalorder %s27, 1
          %s2144 = scalar_select %p2143, %s27, 1
          %p2145 = scmp.lt.s32.totalorder %s2142, 63
          %s2146 = scalar_select %p2145, %s2142, 63
          %s2147 = smul.addr %s2144, 64
          %s2148 = sadd.s32 %s2146, %s2147
          %s2149 = smul.addr %s2148, 8
          %s2150 = scalar_lea.vmem %s7, %s2149
        $region64: #{tpu_custom_call.1} parent=59 // pred_fallthru
          _
      $region60: #{tpu_custom_call.1} parent=5 // pred_fallthru
        _
    $region6: #{tpu_custom_call.1} parent=1 // loop_footer
      %s20 = sadd.s32 1, %s16
    $region7: #{tpu_custom_call.1} parent=1 // loop_footer_branch
      %15 = sbr.rel target = $region3
    $region8: #{tpu_custom_call.1} parent=1 // loop_exit
      _
    %2151 = vsyncpa [#allocation3], 1
    %s2152 = scalar_lea.sflag [#allocation3], 1
    %2153 = vsyncpa %s2152, 1

</llo_original>
